<compile_context>
chip_gen: v7x
topology: tpu7x:2x2x1
jax: 0.10.0
libtpu: 0.0.40
codegen_flags: <defaults>
</compile_context>

<pallas_src>
import functools

import jax
import jax.numpy as jnp
from jax.experimental import pallas as pl
from jax.experimental.pallas import tpu as pltpu


# 48 MiB: above the default scoped VMEM on v5e (16 MiB) / v6e / v7x (32 MiB),
# below v7x's 64 MiB physical VMEM, so it is safe on all three generations.
_VMEM_LIMIT_BYTES = 48 * 1024 * 1024


# ----------------------------- helpers -------------------------------------
def _layernorm(x, g, b, eps=1e-5):
    mu = jnp.mean(x, axis=-1, keepdims=True)
    var = jnp.mean((x - mu) ** 2, axis=-1, keepdims=True)
    return (x - mu) * jax.lax.rsqrt(var + eps) * g + b


def _pick_tile(total, target, align):
    """Largest multiple of `align` <= target that divides `total`, else `total`."""
    if total <= target:
        return total
    t = (target // align) * align
    while t >= align:
        if total % t == 0:
            return t
        t -= align
    return total


# --------------------------- encoder stack kernel ---------------------------
def _encoder_stack_kernel(x_ref, wqkv_ref, bqkv_ref, wo_ref, bo_ref,
                          g1_ref, be1_ref, w1_ref, b1_ref, w2_ref, b2_ref,
                          g2_ref, be2_ref, o_ref, *, num_heads, head_dim,
                          num_layers):
    """Runs the full (weight-shared) encoder stack on one (S, E) block.

    x_ref block is (S, E): one effective-batch element (one T position), S
    attention tokens (= PyTorch batch dim, because batch_first=False).
    All num_layers layers run inside the kernel (lax.fori_loop), so the
    activation never leaves VMEM between layers.
    """
    E = num_heads * head_dim
    scale = 1.0 / (head_dim ** 0.5)
    bf16 = jnp.bfloat16

    def one_layer(_, x):                         # x: (S, E) float32
        # --- self attention (post-norm TransformerEncoderLayer) ---
        qkv = jnp.dot(x.astype(bf16), wqkv_ref[...],
                      preferred_element_type=jnp.float32) + bqkv_ref[...]

        # Per-head attention with 2-D MXU matmuls.  Instead of concatenating
        # head outputs (XLU lane shuffles), each head's context is pushed
        # straight through its slice of the output projection and accumulated
        # in f32.
        attn = bo_ref[...]                        # (1, E), broadcasts up
        for h in range(num_heads):
            lo, hi = h * head_dim, (h + 1) * head_dim
            qh = qkv[:, lo:hi].astype(bf16)
            kh = qkv[:, E + lo:E + hi].astype(bf16)
            vh = qkv[:, 2 * E + lo:2 * E + hi].astype(bf16)

            s = jax.lax.dot_general(qh, kh, (((1,), (1,)), ((), ())),
                                    preferred_element_type=jnp.float32) * scale
            s = s - jnp.max(s, axis=-1, keepdims=True)
            p = jnp.exp(s)
            # Divide -> EUP reciprocal + multiply (frees the VALU slot).
            p = p * pl.reciprocal(jnp.sum(p, axis=-1, keepdims=True),
                                  approx=True)
            ctx_h = jnp.dot(p.astype(bf16), vh,
                            preferred_element_type=jnp.float32)
            attn = attn + jnp.dot(ctx_h.astype(bf16), wo_ref[lo:hi, :],
                                  preferred_element_type=jnp.float32)

        y = _layernorm(x + attn, g1_ref[...], be1_ref[...])      # norm1 (f32)

        # --- feed-forward (relu) ---
        ff = jnp.dot(y.astype(bf16), w1_ref[...],
                     preferred_element_type=jnp.float32) + b1_ref[...]
        ff = jnp.maximum(ff, 0.0)
        ff = jnp.dot(ff.astype(bf16), w2_ref[...],
                     preferred_element_type=jnp.float32) + b2_ref[...]

        return _layernorm(y + ff, g2_ref[...], be2_ref[...])     # norm2 (f32)

    x = x_ref[...].astype(jnp.float32)
    x = jax.lax.fori_loop(0, num_layers, one_layer, x)
    o_ref[...] = x.astype(o_ref.dtype)


def encoder_stack_pallas(x, p, num_heads, num_layers):
    # x: (N, S, E)  with N = effective batch (= T), S = attention axis (= B)
    N, S, E = x.shape
    F = p["w1"].shape[1]
    head_dim = E // num_heads
    kernel = functools.partial(_encoder_stack_kernel, num_heads=num_heads,
                               head_dim=head_dim, num_layers=num_layers)

    bf = lambda a: a.astype(jnp.bfloat16)

    def full(shape):
        return pl.BlockSpec(shape, lambda n: (0,) * len(shape))

    return pl.pallas_call(
        kernel,
        out_shape=jax.ShapeDtypeStruct((N, S, E), jnp.float32),
        grid=(N,),
        in_specs=[
            pl.BlockSpec((None, S, E), lambda n: (n, 0, 0)),   # activations
            full((E, 3 * E)), full((1, 3 * E)),                # qkv proj (bf16 / f32 bias)
            full((E, E)), full((1, E)),                        # attn out proj
            full((1, E)), full((1, E)),                        # layernorm 1
            full((E, F)), full((1, F)),                        # ffn linear 1
            full((F, E)), full((1, E)),                        # ffn linear 2
            full((1, E)), full((1, E)),                        # layernorm 2
        ],
        out_specs=pl.BlockSpec((None, S, E), lambda n: (n, 0, 0)),
        compiler_params=pltpu.CompilerParams(
            dimension_semantics=("parallel",),        # shards over TCs on v7x
            vmem_limit_bytes=_VMEM_LIMIT_BYTES),
    )(x, bf(p["wqkv"]), p["bqkv"], bf(p["wo"]), p["bo"],
      p["g1"], p["be1"], bf(p["w1"]), p["b1"], bf(p["w2"]), p["b2"],
      p["g2"], p["be2"])


# --------------------------- output projection ------------------------------
def _linear_kernel(x_ref, w_ref, b_ref, o_ref):
    o_ref[...] = (jnp.dot(x_ref[...], w_ref[...],
                          preferred_element_type=jnp.float32)
                  + b_ref[...]).astype(o_ref.dtype)


def linear_pallas(x2d, w, b2d, *, tm_target=256, tv_target=2048):
    """Tiled (M, E) x (E, V) projection; both grid axes parallel, lane-dense V."""
    M, E = x2d.shape
    V = w.shape[1]
    tm = _pick_tile(M, tm_target, 8)
    tv = _pick_tile(V, tv_target, 128)
    return pl.pallas_call(
        _linear_kernel,
        out_shape=jax.ShapeDtypeStruct((M, V), jnp.float32),
        grid=(M // tm, V // tv),
        in_specs=[pl.BlockSpec((tm, E), lambda i, j: (i, 0)),
                  pl.BlockSpec((E, tv), lambda i, j: (0, j)),
                  pl.BlockSpec((1, tv), lambda i, j: (0, j))],
        out_specs=pl.BlockSpec((tm, tv), lambda i, j: (i, j)),
        compiler_params=pltpu.CompilerParams(
            dimension_semantics=("parallel", "parallel"),
            vmem_limit_bytes=_VMEM_LIMIT_BYTES),
    )(x2d, w, b2d)


# ----------------------------- model glue -----------------------------------
def model_forward(params, tokens, num_heads, num_layers):
    B, T = tokens.shape
    # TODO(synk): the token-id embedding gather is data-dependent and is left
    # to XLA glue; the positional add is fused into the same op.
    x = params["emb"][tokens] + params["pos_emb"][jnp.arange(T)][None, :, :]  # (B,T,E)
    # batch_first=False quirk: present (N=T, S=B, E) to the encoder kernel.
    x = jnp.transpose(x, (1, 0, 2))
    x = encoder_stack_pallas(x, params["layer"], num_heads, num_layers)
    x = jnp.transpose(x, (1, 0, 2))                                           # (B,T,E)
    E = x.shape[-1]
    logits = linear_pallas(x.reshape(B * T, E).astype(jnp.bfloat16),
                           params["w_out"].astype(jnp.bfloat16),
                           params["b_out"])
    return logits.reshape(B, T, -1)


def reference_forward(params, tokens, num_heads, num_layers):
    """Pure-JAX reference mirroring PyTorch semantics (batch_first=False) and
    the kernel's precision scheme (bf16 matmul operands, f32 accumulation)."""
    B, T = tokens.shape
    x = params["emb"][tokens] + params["pos_emb"][jnp.arange(T)][None, :, :]  # (S=B,N=T,E)
    p = params["layer"]
    E = x.shape[-1]
    hd = E // num_heads
    scale = 1.0 / (hd ** 0.5)
    bf = lambda a: a.astype(jnp.bfloat16)
    wqkv, wo, w1, w2 = bf(p["wqkv"]), bf(p["wo"]), bf(p["w1"]), bf(p["w2"])
    for _ in range(num_layers):
        qkv = jnp.einsum("sne,ef->snf", bf(x), wqkv,
                         preferred_element_type=jnp.float32) + p["bqkv"]
        q = bf(qkv[..., :E]).reshape(B, T, num_heads, hd)
        k = bf(qkv[..., E:2 * E]).reshape(B, T, num_heads, hd)
        v = bf(qkv[..., 2 * E:]).reshape(B, T, num_heads, hd)
        s = jnp.einsum("snhd,unhd->nhsu", q, k,
                       preferred_element_type=jnp.float32) * scale
        a = jax.nn.softmax(s, axis=-1)
        ctx = jnp.einsum("nhsu,unhd->snhd", bf(a), v,
                         preferred_element_type=jnp.float32).reshape(B, T, E)
        attn = jnp.einsum("sne,ef->snf", bf(ctx), wo,
                          preferred_element_type=jnp.float32) + p["bo"]
        y = _layernorm(x + attn, p["g1"], p["be1"])
        ff = jnp.einsum("sne,ef->snf", bf(y), w1,
                        preferred_element_type=jnp.float32) + p["b1"]
        ff = jnp.maximum(ff, 0.0)
        ff = jnp.einsum("snf,fe->sne", bf(ff), w2,
                        preferred_element_type=jnp.float32) + p["b2"]
        x = _layernorm(y + ff, p["g2"], p["be2"])
    return jnp.einsum("sne,ev->snv", bf(x), bf(params["w_out"]),
                      preferred_element_type=jnp.float32) + params["b_out"]


def init_params(key, vocab, E, F, ctx):
    ks = jax.random.split(key, 12)
    n = lambda k, shape, s=0.05: jax.random.normal(k, shape, jnp.float32) * s
    return {
        "emb": n(ks[0], (vocab, E)),
        "pos_emb": n(ks[1], (ctx, E)),
        "layer": {
            "wqkv": n(ks[2], (E, 3 * E)),
            "bqkv": n(ks[3], (1, 3 * E)),
            "wo": n(ks[4], (E, E)),
            "bo": n(ks[5], (1, E)),
            "g1": jnp.ones((1, E), jnp.float32),
            "be1": jnp.zeros((1, E), jnp.float32),
            "w1": n(ks[6], (E, F)),
            "b1": n(ks[7], (1, F)),
            "w2": n(ks[8], (F, E)),
            "b2": n(ks[9], (1, E)),
            "g2": jnp.ones((1, E), jnp.float32),
            "be2": jnp.zeros((1, E), jnp.float32),
        },
        "w_out": n(ks[10], (E, vocab)),
        "b_out": n(ks[11], (1, vocab)),
    }


if __name__ == "__main__":
    VOCAB, E, HEADS, LAYERS, FF, CTX = 128, 32, 4, 2, 64, 16
    B, T = 2, 8

    key = jax.random.PRNGKey(0)
    pkey, tkey = jax.random.split(key)
    params = init_params(pkey, VOCAB, E, FF, CTX)
    tokens = jax.random.randint(tkey, (B, T), 0, VOCAB, dtype=jnp.int32)

    forward = jax.jit(functools.partial(model_forward,
                                        num_heads=HEADS, num_layers=LAYERS))
    logits = jax.block_until_ready(forward(params, tokens))

    assert logits.shape == (B, T, VOCAB)
    ref = reference_forward(params, tokens, HEADS, LAYERS)
    if not bool(jnp.allclose(logits, ref, rtol=2e-3, atol=2e-3)):
        err = float(jnp.max(jnp.abs(logits - ref)))
        raise AssertionError(
            f"Pallas output does not match pure-JAX reference (max err {err})")

    # TODO(synk): training-mode dropout / probabilistic layer-drop are RNG-driven
    # no-ops in eval and are not reproduced here.
    print("KERNEL_OK")
</pallas_src>

<mosaic_0001>
module attributes {stable_mosaic.version = 11 : i64} {
  func.func @_linear_kernel(%arg0: i32, %arg1: i32, %arg2: memref<16x32xbf16, #tpu.memory_space<vmem>>, %arg3: memref<32x128xbf16, #tpu.memory_space<vmem>>, %arg4: memref<1x128xf32, #tpu.memory_space<vmem>>, %arg5: memref<16x128xf32, #tpu.memory_space<vmem>>) attributes {dimension_semantics = [#tpu.dimension_semantics<parallel>, #tpu.dimension_semantics<parallel>], iteration_bounds = array<i64: 1, 1>, scalar_prefetch = 0 : i64, scratch_operands = 0 : i64, tpu.core_type = #tpu.core_type<tc>, window_params = [{transform_indices = @transform_0, window_bounds = array<i64: 16, 32>}, {transform_indices = @transform_1, window_bounds = array<i64: 32, 128>}, {transform_indices = @transform_2, window_bounds = array<i64: 1, 128>}, {transform_indices = @transform_3, window_bounds = array<i64: 16, 128>}]} {
    %c0 = arith.constant 0 : index
    %c0_0 = arith.constant 0 : index
    %0 = vector.load %arg2[%c0, %c0_0] : memref<16x32xbf16, #tpu.memory_space<vmem>>, vector<16x32xbf16>
    %c0_1 = arith.constant 0 : index
    %c0_2 = arith.constant 0 : index
    %1 = vector.load %arg3[%c0_1, %c0_2] : memref<32x128xbf16, #tpu.memory_space<vmem>>, vector<32x128xbf16>
    %cst = arith.constant dense<0.000000e+00> : vector<16x128xf32>
    %2 = tpu.matmul %0, %1, %cst {dimension_numbers = #tpu.dot_dimension_numbers<[1], [0], [0], [1], [0, 0, 1, 1], [], []>} : vector<16x32xbf16>, vector<32x128xbf16>, vector<16x128xf32> -> vector<16x128xf32>
    %c0_3 = arith.constant 0 : index
    %c0_4 = arith.constant 0 : index
    %3 = vector.load %arg4[%c0_3, %c0_4] : memref<1x128xf32, #tpu.memory_space<vmem>>, vector<1x128xf32>
    %4 = vector.broadcast %3 : vector<1x128xf32> to vector<16x128xf32>
    %5 = arith.addf %2, %4 : vector<16x128xf32>
    %c0_5 = arith.constant 0 : index
    %c0_6 = arith.constant 0 : index
    %6 = vector.load %arg5[%c0_5, %c0_6] : memref<16x128xf32, #tpu.memory_space<vmem>>, vector<16x128xf32>
    tpu.vector_store %arg5[%c0_5, %c0_6], %5 {strides = array<i32>} : memref<16x128xf32, #tpu.memory_space<vmem>>, vector<16x128xf32>,
    return
  }
  func.func @transform_0(%arg0: i32, %arg1: i32) -> (i32, i32) {
    %c0_i32 = arith.constant 0 : i32
    %c0_i32_0 = arith.constant 0 : i32
    return %arg0, %c0_i32 : i32, i32
  }
  func.func @transform_1(%arg0: i32, %arg1: i32) -> (i32, i32) {
    %c0_i32 = arith.constant 0 : i32
    %c0_i32_0 = arith.constant 0 : i32
    return %c0_i32, %arg1 : i32, i32
  }
  func.func @transform_2(%arg0: i32, %arg1: i32) -> (i32, i32) {
    %c0_i32 = arith.constant 0 : i32
    %c0_i32_0 = arith.constant 0 : i32
    return %c0_i32, %arg1 : i32, i32
  }
  func.func @transform_3(%arg0: i32, %arg1: i32) -> (i32, i32) {
    %c0_i32 = arith.constant 0 : i32
    return %arg0, %arg1 : i32, i32
  }
}

module attributes {stable_mosaic.version = 11 : i64} {
  func.func @_encoder_stack_kernel(%arg0: i32, %arg1: memref<1x2x32xf32, #tpu.memory_space<vmem>>, %arg2: memref<32x96xbf16, #tpu.memory_space<vmem>>, %arg3: memref<1x96xf32, #tpu.memory_space<vmem>>, %arg4: memref<32x32xbf16, #tpu.memory_space<vmem>>, %arg5: memref<1x32xf32, #tpu.memory_space<vmem>>, %arg6: memref<1x32xf32, #tpu.memory_space<vmem>>, %arg7: memref<1x32xf32, #tpu.memory_space<vmem>>, %arg8: memref<32x64xbf16, #tpu.memory_space<vmem>>, %arg9: memref<1x64xf32, #tpu.memory_space<vmem>>, %arg10: memref<64x32xbf16, #tpu.memory_space<vmem>>, %arg11: memref<1x32xf32, #tpu.memory_space<vmem>>, %arg12: memref<1x32xf32, #tpu.memory_space<vmem>>, %arg13: memref<1x32xf32, #tpu.memory_space<vmem>>, %arg14: memref<1x2x32xf32, #tpu.memory_space<vmem>>) attributes {dimension_semantics = [#tpu.dimension_semantics<parallel>], iteration_bounds = array<i64: 8>, scalar_prefetch = 0 : i64, scratch_operands = 0 : i64, tpu.core_type = #tpu.core_type<tc>, window_params = [{transform_indices = @transform_0, window_bounds = array<i64: 1, 2, 32>}, {pipeline_mode = #tpu.pipeline_mode<synchronous>, transform_indices = @transform_1, window_bounds = array<i64: 32, 96>}, {pipeline_mode = #tpu.pipeline_mode<synchronous>, transform_indices = @transform_2, window_bounds = array<i64: 1, 96>}, {pipeline_mode = #tpu.pipeline_mode<synchronous>, transform_indices = @transform_3, window_bounds = array<i64: 32, 32>}, {pipeline_mode = #tpu.pipeline_mode<synchronous>, transform_indices = @transform_4, window_bounds = array<i64: 1, 32>}, {pipeline_mode = #tpu.pipeline_mode<synchronous>, transform_indices = @transform_5, window_bounds = array<i64: 1, 32>}, {pipeline_mode = #tpu.pipeline_mode<synchronous>, transform_indices = @transform_6, window_bounds = array<i64: 1, 32>}, {pipeline_mode = #tpu.pipeline_mode<synchronous>, transform_indices = @transform_7, window_bounds = array<i64: 32, 64>}, {pipeline_mode = #tpu.pipeline_mode<synchronous>, transform_indices = @transform_8, window_bounds = array<i64: 1, 64>}, {pipeline_mode = #tpu.pipeline_mode<synchronous>, transform_indices = @transform_9, window_bounds = array<i64: 64, 32>}, {pipeline_mode = #tpu.pipeline_mode<synchronous>, transform_indices = @transform_10, window_bounds = array<i64: 1, 32>}, {pipeline_mode = #tpu.pipeline_mode<synchronous>, transform_indices = @transform_11, window_bounds = array<i64: 1, 32>}, {pipeline_mode = #tpu.pipeline_mode<synchronous>, transform_indices = @transform_12, window_bounds = array<i64: 1, 32>}, {transform_indices = @transform_13, window_bounds = array<i64: 1, 2, 32>}]} {
    %c0 = arith.constant 0 : index
    %c0_0 = arith.constant 0 : index
    %c0_1 = arith.constant 0 : index
    %0 = vector.load %arg1[%c0, %c0_0, %c0_1] : memref<1x2x32xf32, #tpu.memory_space<vmem>>, vector<1x2x32xf32>
    %1 = vector.shape_cast %0 : vector<1x2x32xf32> to vector<2x32xf32>
    %c0_i32 = arith.constant 0 : i32
    %c2_i32 = arith.constant 2 : i32
    %2 = arith.addi %c0_i32, %c2_i32 : i32
    %c1_i32 = arith.constant 1 : i32
    %3 = scf.for %arg15 = %c0_i32 to %2 step %c1_i32 iter_args(%arg16 = %1) -> (vector<2x32xf32>)  : i32 {
      %7 = arith.truncf %arg16 : vector<2x32xf32> to vector<2x32xbf16>
      %c0_5 = arith.constant 0 : index
      %c0_6 = arith.constant 0 : index
      %8 = vector.load %arg2[%c0_5, %c0_6] : memref<32x96xbf16, #tpu.memory_space<vmem>>, vector<32x96xbf16>
      %cst = arith.constant dense<0.000000e+00> : vector<2x96xf32>
      %9 = tpu.matmul %7, %8, %cst {dimension_numbers = #tpu.dot_dimension_numbers<[1], [0], [0], [1], [0, 0, 1, 1], [], []>} : vector<2x32xbf16>, vector<32x96xbf16>, vector<2x96xf32> -> vector<2x96xf32>
      %c0_7 = arith.constant 0 : index
      %c0_8 = arith.constant 0 : index
      %10 = vector.load %arg3[%c0_7, %c0_8] : memref<1x96xf32, #tpu.memory_space<vmem>>, vector<1x96xf32>
      %11 = vector.broadcast %10 : vector<1x96xf32> to vector<2x96xf32>
      %12 = arith.addf %9, %11 : vector<2x96xf32>
      %c0_9 = arith.constant 0 : index
      %c0_10 = arith.constant 0 : index
      %13 = vector.load %arg5[%c0_9, %c0_10] : memref<1x32xf32, #tpu.memory_space<vmem>>, vector<1x32xf32>
      %14 = vector.extract_strided_slice %12 {offsets = [0, 0], sizes = [2, 8], strides = [1, 1]} : vector<2x96xf32> to vector<2x8xf32>
      %15 = arith.truncf %14 : vector<2x8xf32> to vector<2x8xbf16>
      %16 = vector.extract_strided_slice %12 {offsets = [0, 32], sizes = [2, 8], strides = [1, 1]} : vector<2x96xf32> to vector<2x8xf32>
      %17 = arith.truncf %16 : vector<2x8xf32> to vector<2x8xbf16>
      %18 = vector.extract_strided_slice %12 {offsets = [0, 64], sizes = [2, 8], strides = [1, 1]} : vector<2x96xf32> to vector<2x8xf32>
      %19 = arith.truncf %18 : vector<2x8xf32> to vector<2x8xbf16>
      %cst_11 = arith.constant dense<0.000000e+00> : vector<2x2xf32>
      %20 = tpu.matmul %15, %17, %cst_11 {dimension_numbers = #tpu.dot_dimension_numbers<[1], [1], [0], [0], [0, 0, 1, 0], [], []>} : vector<2x8xbf16>, vector<2x8xbf16>, vector<2x2xf32> -> vector<2x2xf32>
      %cst_12 = arith.constant 0.353553385 : f32
      %21 = vector.broadcast %cst_12 : f32 to vector<2x2xf32>
      %22 = arith.mulf %20, %21 : vector<2x2xf32>
      %cst_13 = arith.constant dense<0xFF800000> : vector<2xf32>
      %23 = vector.multi_reduction <maximumf>, %22, %cst_13 [1] : vector<2x2xf32> to vector<2xf32>
      %24 = vector.shape_cast %23 : vector<2xf32> to vector<2x1xf32>
      %25 = vector.broadcast %24 : vector<2x1xf32> to vector<2x2xf32>
      %26 = arith.subf %22, %25 : vector<2x2xf32>
      %27 = math.exp %26 : vector<2x2xf32>
      %cst_14 = arith.constant dense<0.000000e+00> : vector<2xf32>
      %28 = vector.multi_reduction <add>, %27, %cst_14 [1] : vector<2x2xf32> to vector<2xf32>
      %29 = vector.shape_cast %28 : vector<2xf32> to vector<2x1xf32>
      %30 = tpu.reciprocal %29 {approx = true} : vector<2x1xf32> -> vector<2x1xf32>
      %31 = vector.broadcast %30 : vector<2x1xf32> to vector<2x2xf32>
      %32 = arith.mulf %27, %31 : vector<2x2xf32>
      %33 = arith.truncf %32 : vector<2x2xf32> to vector<2x2xbf16>
      %cst_15 = arith.constant dense<0.000000e+00> : vector<2x8xf32>
      %34 = tpu.matmul %33, %19, %cst_15 {dimension_numbers = #tpu.dot_dimension_numbers<[1], [0], [0], [1], [0, 0, 1, 1], [], []>} : vector<2x2xbf16>, vector<2x8xbf16>, vector<2x8xf32> -> vector<2x8xf32>
      %35 = arith.truncf %34 : vector<2x8xf32> to vector<2x8xbf16>
      %c0_16 = arith.constant 0 : index
      %c0_17 = arith.constant 0 : index
      %36 = vector.load %arg4[%c0_16, %c0_17] : memref<32x32xbf16, #tpu.memory_space<vmem>>, vector<8x32xbf16>
      %cst_18 = arith.constant dense<0.000000e+00> : vector<2x32xf32>
      %37 = tpu.matmul %35, %36, %cst_18 {dimension_numbers = #tpu.dot_dimension_numbers<[1], [0], [0], [1], [0, 0, 1, 1], [], []>} : vector<2x8xbf16>, vector<8x32xbf16>, vector<2x32xf32> -> vector<2x32xf32>
      %38 = vector.broadcast %13 : vector<1x32xf32> to vector<2x32xf32>
      %39 = arith.addf %38, %37 : vector<2x32xf32>
      %40 = vector.extract_strided_slice %12 {offsets = [0, 8], sizes = [2, 8], strides = [1, 1]} : vector<2x96xf32> to vector<2x8xf32>
      %41 = arith.truncf %40 : vector<2x8xf32> to vector<2x8xbf16>
      %42 = vector.extract_strided_slice %12 {offsets = [0, 40], sizes = [2, 8], strides = [1, 1]} : vector<2x96xf32> to vector<2x8xf32>
      %43 = arith.truncf %42 : vector<2x8xf32> to vector<2x8xbf16>
      %44 = vector.extract_strided_slice %12 {offsets = [0, 72], sizes = [2, 8], strides = [1, 1]} : vector<2x96xf32> to vector<2x8xf32>
      %45 = arith.truncf %44 : vector<2x8xf32> to vector<2x8xbf16>
      %cst_19 = arith.constant dense<0.000000e+00> : vector<2x2xf32>
      %46 = tpu.matmul %41, %43, %cst_19 {dimension_numbers = #tpu.dot_dimension_numbers<[1], [1], [0], [0], [0, 0, 1, 0], [], []>} : vector<2x8xbf16>, vector<2x8xbf16>, vector<2x2xf32> -> vector<2x2xf32>
      %cst_20 = arith.constant 0.353553385 : f32
      %47 = vector.broadcast %cst_20 : f32 to vector<2x2xf32>
      %48 = arith.mulf %46, %47 : vector<2x2xf32>
      %cst_21 = arith.constant dense<0xFF800000> : vector<2xf32>
      %49 = vector.multi_reduction <maximumf>, %48, %cst_21 [1] : vector<2x2xf32> to vector<2xf32>
      %50 = vector.shape_cast %49 : vector<2xf32> to vector<2x1xf32>
      %51 = vector.broadcast %50 : vector<2x1xf32> to vector<2x2xf32>
      %52 = arith.subf %48, %51 : vector<2x2xf32>
      %53 = math.exp %52 : vector<2x2xf32>
      %cst_22 = arith.constant dense<0.000000e+00> : vector<2xf32>
      %54 = vector.multi_reduction <add>, %53, %cst_22 [1] : vector<2x2xf32> to vector<2xf32>
      %55 = vector.shape_cast %54 : vector<2xf32> to vector<2x1xf32>
      %56 = tpu.reciprocal %55 {approx = true} : vector<2x1xf32> -> vector<2x1xf32>
      %57 = vector.broadcast %56 : vector<2x1xf32> to vector<2x2xf32>
      %58 = arith.mulf %53, %57 : vector<2x2xf32>
      %59 = arith.truncf %58 : vector<2x2xf32> to vector<2x2xbf16>
      %cst_23 = arith.constant dense<0.000000e+00> : vector<2x8xf32>
      %60 = tpu.matmul %59, %45, %cst_23 {dimension_numbers = #tpu.dot_dimension_numbers<[1], [0], [0], [1], [0, 0, 1, 1], [], []>} : vector<2x2xbf16>, vector<2x8xbf16>, vector<2x8xf32> -> vector<2x8xf32>
      %61 = arith.truncf %60 : vector<2x8xf32> to vector<2x8xbf16>
      %c8 = arith.constant 8 : index
      %c0_24 = arith.constant 0 : index
      %62 = vector.load %arg4[%c8, %c0_24] : memref<32x32xbf16, #tpu.memory_space<vmem>>, vector<8x32xbf16>
      %cst_25 = arith.constant dense<0.000000e+00> : vector<2x32xf32>
      %63 = tpu.matmul %61, %62, %cst_25 {dimension_numbers = #tpu.dot_dimension_numbers<[1], [0], [0], [1], [0, 0, 1, 1], [], []>} : vector<2x8xbf16>, vector<8x32xbf16>, vector<2x32xf32> -> vector<2x32xf32>
      %64 = arith.addf %39, %63 : vector<2x32xf32>
      %65 = vector.extract_strided_slice %12 {offsets = [0, 16], sizes = [2, 8], strides = [1, 1]} : vector<2x96xf32> to vector<2x8xf32>
      %66 = arith.truncf %65 : vector<2x8xf32> to vector<2x8xbf16>
      %67 = vector.extract_strided_slice %12 {offsets = [0, 48], sizes = [2, 8], strides = [1, 1]} : vector<2x96xf32> to vector<2x8xf32>
      %68 = arith.truncf %67 : vector<2x8xf32> to vector<2x8xbf16>
      %69 = vector.extract_strided_slice %12 {offsets = [0, 80], sizes = [2, 8], strides = [1, 1]} : vector<2x96xf32> to vector<2x8xf32>
      %70 = arith.truncf %69 : vector<2x8xf32> to vector<2x8xbf16>
      %cst_26 = arith.constant dense<0.000000e+00> : vector<2x2xf32>
      %71 = tpu.matmul %66, %68, %cst_26 {dimension_numbers = #tpu.dot_dimension_numbers<[1], [1], [0], [0], [0, 0, 1, 0], [], []>} : vector<2x8xbf16>, vector<2x8xbf16>, vector<2x2xf32> -> vector<2x2xf32>
      %cst_27 = arith.constant 0.353553385 : f32
      %72 = vector.broadcast %cst_27 : f32 to vector<2x2xf32>
      %73 = arith.mulf %71, %72 : vector<2x2xf32>
      %cst_28 = arith.constant dense<0xFF800000> : vector<2xf32>
      %74 = vector.multi_reduction <maximumf>, %73, %cst_28 [1] : vector<2x2xf32> to vector<2xf32>
      %75 = vector.shape_cast %74 : vector<2xf32> to vector<2x1xf32>
      %76 = vector.broadcast %75 : vector<2x1xf32> to vector<2x2xf32>
      %77 = arith.subf %73, %76 : vector<2x2xf32>
      %78 = math.exp %77 : vector<2x2xf32>
      %cst_29 = arith.constant dense<0.000000e+00> : vector<2xf32>
      %79 = vector.multi_reduction <add>, %78, %cst_29 [1] : vector<2x2xf32> to vector<2xf32>
      %80 = vector.shape_cast %79 : vector<2xf32> to vector<2x1xf32>
      %81 = tpu.reciprocal %80 {approx = true} : vector<2x1xf32> -> vector<2x1xf32>
      %82 = vector.broadcast %81 : vector<2x1xf32> to vector<2x2xf32>
      %83 = arith.mulf %78, %82 : vector<2x2xf32>
      %84 = arith.truncf %83 : vector<2x2xf32> to vector<2x2xbf16>
      %cst_30 = arith.constant dense<0.000000e+00> : vector<2x8xf32>
      %85 = tpu.matmul %84, %70, %cst_30 {dimension_numbers = #tpu.dot_dimension_numbers<[1], [0], [0], [1], [0, 0, 1, 1], [], []>} : vector<2x2xbf16>, vector<2x8xbf16>, vector<2x8xf32> -> vector<2x8xf32>
      %86 = arith.truncf %85 : vector<2x8xf32> to vector<2x8xbf16>
      %c16 = arith.constant 16 : index
      %c0_31 = arith.constant 0 : index
      %87 = vector.load %arg4[%c16, %c0_31] : memref<32x32xbf16, #tpu.memory_space<vmem>>, vector<8x32xbf16>
      %cst_32 = arith.constant dense<0.000000e+00> : vector<2x32xf32>
      %88 = tpu.matmul %86, %87, %cst_32 {dimension_numbers = #tpu.dot_dimension_numbers<[1], [0], [0], [1], [0, 0, 1, 1], [], []>} : vector<2x8xbf16>, vector<8x32xbf16>, vector<2x32xf32> -> vector<2x32xf32>
      %89 = arith.addf %64, %88 : vector<2x32xf32>
      %90 = vector.extract_strided_slice %12 {offsets = [0, 24], sizes = [2, 8], strides = [1, 1]} : vector<2x96xf32> to vector<2x8xf32>
      %91 = arith.truncf %90 : vector<2x8xf32> to vector<2x8xbf16>
      %92 = vector.extract_strided_slice %12 {offsets = [0, 56], sizes = [2, 8], strides = [1, 1]} : vector<2x96xf32> to vector<2x8xf32>
      %93 = arith.truncf %92 : vector<2x8xf32> to vector<2x8xbf16>
      %94 = vector.extract_strided_slice %12 {offsets = [0, 88], sizes = [2, 8], strides = [1, 1]} : vector<2x96xf32> to vector<2x8xf32>
      %95 = arith.truncf %94 : vector<2x8xf32> to vector<2x8xbf16>
      %cst_33 = arith.constant dense<0.000000e+00> : vector<2x2xf32>
      %96 = tpu.matmul %91, %93, %cst_33 {dimension_numbers = #tpu.dot_dimension_numbers<[1], [1], [0], [0], [0, 0, 1, 0], [], []>} : vector<2x8xbf16>, vector<2x8xbf16>, vector<2x2xf32> -> vector<2x2xf32>
      %cst_34 = arith.constant 0.353553385 : f32
      %97 = vector.broadcast %cst_34 : f32 to vector<2x2xf32>
      %98 = arith.mulf %96, %97 : vector<2x2xf32>
      %cst_35 = arith.constant dense<0xFF800000> : vector<2xf32>
      %99 = vector.multi_reduction <maximumf>, %98, %cst_35 [1] : vector<2x2xf32> to vector<2xf32>
      %100 = vector.shape_cast %99 : vector<2xf32> to vector<2x1xf32>
      %101 = vector.broadcast %100 : vector<2x1xf32> to vector<2x2xf32>
      %102 = arith.subf %98, %101 : vector<2x2xf32>
      %103 = math.exp %102 : vector<2x2xf32>
      %cst_36 = arith.constant dense<0.000000e+00> : vector<2xf32>
      %104 = vector.multi_reduction <add>, %103, %cst_36 [1] : vector<2x2xf32> to vector<2xf32>
      %105 = vector.shape_cast %104 : vector<2xf32> to vector<2x1xf32>
      %106 = tpu.reciprocal %105 {approx = true} : vector<2x1xf32> -> vector<2x1xf32>
      %107 = vector.broadcast %106 : vector<2x1xf32> to vector<2x2xf32>
      %108 = arith.mulf %103, %107 : vector<2x2xf32>
      %109 = arith.truncf %108 : vector<2x2xf32> to vector<2x2xbf16>
      %cst_37 = arith.constant dense<0.000000e+00> : vector<2x8xf32>
      %110 = tpu.matmul %109, %95, %cst_37 {dimension_numbers = #tpu.dot_dimension_numbers<[1], [0], [0], [1], [0, 0, 1, 1], [], []>} : vector<2x2xbf16>, vector<2x8xbf16>, vector<2x8xf32> -> vector<2x8xf32>
      %111 = arith.truncf %110 : vector<2x8xf32> to vector<2x8xbf16>
      %c24 = arith.constant 24 : index
      %c0_38 = arith.constant 0 : index
      %112 = vector.load %arg4[%c24, %c0_38] : memref<32x32xbf16, #tpu.memory_space<vmem>>, vector<8x32xbf16>
      %cst_39 = arith.constant dense<0.000000e+00> : vector<2x32xf32>
      %113 = tpu.matmul %111, %112, %cst_39 {dimension_numbers = #tpu.dot_dimension_numbers<[1], [0], [0], [1], [0, 0, 1, 1], [], []>} : vector<2x8xbf16>, vector<8x32xbf16>, vector<2x32xf32> -> vector<2x32xf32>
      %114 = arith.addf %89, %113 : vector<2x32xf32>
      %115 = arith.addf %arg16, %114 : vector<2x32xf32>
      %c0_40 = arith.constant 0 : index
      %c0_41 = arith.constant 0 : index
      %116 = vector.load %arg6[%c0_40, %c0_41] : memref<1x32xf32, #tpu.memory_space<vmem>>, vector<1x32xf32>
      %c0_42 = arith.constant 0 : index
      %c0_43 = arith.constant 0 : index
      %117 = vector.load %arg7[%c0_42, %c0_43] : memref<1x32xf32, #tpu.memory_space<vmem>>, vector<1x32xf32>
      %cst_44 = arith.constant dense<0.000000e+00> : vector<2xf32>
      %118 = vector.multi_reduction <add>, %115, %cst_44 [1] : vector<2x32xf32> to vector<2xf32>
      %119 = vector.shape_cast %118 : vector<2xf32> to vector<2x1xf32>
      %cst_45 = arith.constant 3.200000e+01 : f32
      %120 = vector.broadcast %cst_45 : f32 to vector<2x1xf32>
      %121 = arith.divf %119, %120 : vector<2x1xf32>
      %122 = vector.broadcast %121 : vector<2x1xf32> to vector<2x32xf32>
      %123 = arith.subf %115, %122 : vector<2x32xf32>
      %124 = arith.mulf %123, %123 : vector<2x32xf32>
      %cst_46 = arith.constant dense<0.000000e+00> : vector<2xf32>
      %125 = vector.multi_reduction <add>, %124, %cst_46 [1] : vector<2x32xf32> to vector<2xf32>
      %126 = vector.shape_cast %125 : vector<2xf32> to vector<2x1xf32>
      %cst_47 = arith.constant 3.200000e+01 : f32
      %127 = vector.broadcast %cst_47 : f32 to vector<2x1xf32>
      %128 = arith.divf %126, %127 : vector<2x1xf32>
      %129 = vector.broadcast %121 : vector<2x1xf32> to vector<2x32xf32>
      %130 = arith.subf %115, %129 : vector<2x32xf32>
      %cst_48 = arith.constant 9.99999974E-6 : f32
      %131 = vector.broadcast %cst_48 : f32 to vector<2x1xf32>
      %132 = arith.addf %128, %131 : vector<2x1xf32>
      %133 = math.rsqrt %132 : vector<2x1xf32>
      %134 = vector.broadcast %133 : vector<2x1xf32> to vector<2x32xf32>
      %135 = arith.mulf %130, %134 : vector<2x32xf32>
      %136 = vector.broadcast %116 : vector<1x32xf32> to vector<2x32xf32>
      %137 = arith.mulf %135, %136 : vector<2x32xf32>
      %138 = vector.broadcast %117 : vector<1x32xf32> to vector<2x32xf32>
      %139 = arith.addf %137, %138 : vector<2x32xf32>
      %140 = arith.truncf %139 : vector<2x32xf32> to vector<2x32xbf16>
      %c0_49 = arith.constant 0 : index
      %c0_50 = arith.constant 0 : index
      %141 = vector.load %arg8[%c0_49, %c0_50] : memref<32x64xbf16, #tpu.memory_space<vmem>>, vector<32x64xbf16>
      %cst_51 = arith.constant dense<0.000000e+00> : vector<2x64xf32>
      %142 = tpu.matmul %140, %141, %cst_51 {dimension_numbers = #tpu.dot_dimension_numbers<[1], [0], [0], [1], [0, 0, 1, 1], [], []>} : vector<2x32xbf16>, vector<32x64xbf16>, vector<2x64xf32> -> vector<2x64xf32>
      %c0_52 = arith.constant 0 : index
      %c0_53 = arith.constant 0 : index
      %143 = vector.load %arg9[%c0_52, %c0_53] : memref<1x64xf32, #tpu.memory_space<vmem>>, vector<1x64xf32>
      %144 = vector.broadcast %143 : vector<1x64xf32> to vector<2x64xf32>
      %145 = arith.addf %142, %144 : vector<2x64xf32>
      %cst_54 = arith.constant 0.000000e+00 : f32
      %146 = vector.broadcast %cst_54 : f32 to vector<2x64xf32>
      %147 = arith.maximumf %145, %146 : vector<2x64xf32>
      %148 = arith.truncf %147 : vector<2x64xf32> to vector<2x64xbf16>
      %c0_55 = arith.constant 0 : index
      %c0_56 = arith.constant 0 : index
      %149 = vector.load %arg10[%c0_55, %c0_56] : memref<64x32xbf16, #tpu.memory_space<vmem>>, vector<64x32xbf16>
      %cst_57 = arith.constant dense<0.000000e+00> : vector<2x32xf32>
      %150 = tpu.matmul %148, %149, %cst_57 {dimension_numbers = #tpu.dot_dimension_numbers<[1], [0], [0], [1], [0, 0, 1, 1], [], []>} : vector<2x64xbf16>, vector<64x32xbf16>, vector<2x32xf32> -> vector<2x32xf32>
      %c0_58 = arith.constant 0 : index
      %c0_59 = arith.constant 0 : index
      %151 = vector.load %arg11[%c0_58, %c0_59] : memref<1x32xf32, #tpu.memory_space<vmem>>, vector<1x32xf32>
      %152 = vector.broadcast %151 : vector<1x32xf32> to vector<2x32xf32>
      %153 = arith.addf %150, %152 : vector<2x32xf32>
      %154 = arith.addf %139, %153 : vector<2x32xf32>
      %c0_60 = arith.constant 0 : index
      %c0_61 = arith.constant 0 : index
      %155 = vector.load %arg12[%c0_60, %c0_61] : memref<1x32xf32, #tpu.memory_space<vmem>>, vector<1x32xf32>
      %c0_62 = arith.constant 0 : index
      %c0_63 = arith.constant 0 : index
      %156 = vector.load %arg13[%c0_62, %c0_63] : memref<1x32xf32, #tpu.memory_space<vmem>>, vector<1x32xf32>
      %cst_64 = arith.constant dense<0.000000e+00> : vector<2xf32>
      %157 = vector.multi_reduction <add>, %154, %cst_64 [1] : vector<2x32xf32> to vector<2xf32>
      %158 = vector.shape_cast %157 : vector<2xf32> to vector<2x1xf32>
      %cst_65 = arith.constant 3.200000e+01 : f32
      %159 = vector.broadcast %cst_65 : f32 to vector<2x1xf32>
      %160 = arith.divf %158, %159 : vector<2x1xf32>
      %161 = vector.broadcast %160 : vector<2x1xf32> to vector<2x32xf32>
      %162 = arith.subf %154, %161 : vector<2x32xf32>
      %163 = arith.mulf %162, %162 : vector<2x32xf32>
      %cst_66 = arith.constant dense<0.000000e+00> : vector<2xf32>
      %164 = vector.multi_reduction <add>, %163, %cst_66 [1] : vector<2x32xf32> to vector<2xf32>
      %165 = vector.shape_cast %164 : vector<2xf32> to vector<2x1xf32>
      %cst_67 = arith.constant 3.200000e+01 : f32
      %166 = vector.broadcast %cst_67 : f32 to vector<2x1xf32>
      %167 = arith.divf %165, %166 : vector<2x1xf32>
      %168 = vector.broadcast %160 : vector<2x1xf32> to vector<2x32xf32>
      %169 = arith.subf %154, %168 : vector<2x32xf32>
      %cst_68 = arith.constant 9.99999974E-6 : f32
      %170 = vector.broadcast %cst_68 : f32 to vector<2x1xf32>
      %171 = arith.addf %167, %170 : vector<2x1xf32>
      %172 = math.rsqrt %171 : vector<2x1xf32>
      %173 = vector.broadcast %172 : vector<2x1xf32> to vector<2x32xf32>
      %174 = arith.mulf %169, %173 : vector<2x32xf32>
      %175 = vector.broadcast %155 : vector<1x32xf32> to vector<2x32xf32>
      %176 = arith.mulf %174, %175 : vector<2x32xf32>
      %177 = vector.broadcast %156 : vector<1x32xf32> to vector<2x32xf32>
      %178 = arith.addf %176, %177 : vector<2x32xf32>
      scf.yield %178 : vector<2x32xf32>
    }
    %c0_2 = arith.constant 0 : index
    %c0_3 = arith.constant 0 : index
    %c0_4 = arith.constant 0 : index
    %4 = vector.load %arg14[%c0_2, %c0_3, %c0_4] : memref<1x2x32xf32, #tpu.memory_space<vmem>>, vector<1x2x32xf32>
    %5 = vector.shape_cast %4 : vector<1x2x32xf32> to vector<2x32xf32>
    %6 = vector.shape_cast %3 : vector<2x32xf32> to vector<1x2x32xf32>
    tpu.vector_store %arg14[%c0_2, %c0_3, %c0_4], %6 {strides = array<i32>} : memref<1x2x32xf32, #tpu.memory_space<vmem>>, vector<1x2x32xf32>,
    return
  }
  func.func @transform_0(%arg0: i32) -> (i32, i32, i32) {
    %c0_i32 = arith.constant 0 : i32
    %c0_i32_0 = arith.constant 0 : i32
    %c0_i32_1 = arith.constant 0 : i32
    return %arg0, %c0_i32, %c0_i32_0 : i32, i32, i32
  }
  func.func @transform_1(%arg0: i32) -> (i32, i32) {
    %c0_i32 = arith.constant 0 : i32
    %c0_i32_0 = arith.constant 0 : i32
    %c0_i32_1 = arith.constant 0 : i32
    return %c0_i32, %c0_i32_0 : i32, i32
  }
  func.func @transform_2(%arg0: i32) -> (i32, i32) {
    %c0_i32 = arith.constant 0 : i32
    %c0_i32_0 = arith.constant 0 : i32
    %c0_i32_1 = arith.constant 0 : i32
    return %c0_i32, %c0_i32_0 : i32, i32
  }
  func.func @transform_3(%arg0: i32) -> (i32, i32) {
    %c0_i32 = arith.constant 0 : i32
    %c0_i32_0 = arith.constant 0 : i32
    %c0_i32_1 = arith.constant 0 : i32
    return %c0_i32, %c0_i32_0 : i32, i32
  }
  func.func @transform_4(%arg0: i32) -> (i32, i32) {
    %c0_i32 = arith.constant 0 : i32
    %c0_i32_0 = arith.constant 0 : i32
    %c0_i32_1 = arith.constant 0 : i32
    return %c0_i32, %c0_i32_0 : i32, i32
  }
  func.func @transform_5(%arg0: i32) -> (i32, i32) {
    %c0_i32 = arith.constant 0 : i32
    %c0_i32_0 = arith.constant 0 : i32
    %c0_i32_1 = arith.constant 0 : i32
    return %c0_i32, %c0_i32_0 : i32, i32
  }
  func.func @transform_6(%arg0: i32) -> (i32, i32) {
    %c0_i32 = arith.constant 0 : i32
    %c0_i32_0 = arith.constant 0 : i32
    %c0_i32_1 = arith.constant 0 : i32
    return %c0_i32, %c0_i32_0 : i32, i32
  }
  func.func @transform_7(%arg0: i32) -> (i32, i32) {
    %c0_i32 = arith.constant 0 : i32
    %c0_i32_0 = arith.constant 0 : i32
    %c0_i32_1 = arith.constant 0 : i32
    return %c0_i32, %c0_i32_0 : i32, i32
  }
  func.func @transform_8(%arg0: i32) -> (i32, i32) {
    %c0_i32 = arith.constant 0 : i32
    %c0_i32_0 = arith.constant 0 : i32
    %c0_i32_1 = arith.constant 0 : i32
    return %c0_i32, %c0_i32_0 : i32, i32
  }
  func.func @transform_9(%arg0: i32) -> (i32, i32) {
    %c0_i32 = arith.constant 0 : i32
    %c0_i32_0 = arith.constant 0 : i32
    %c0_i32_1 = arith.constant 0 : i32
    return %c0_i32, %c0_i32_0 : i32, i32
  }
  func.func @transform_10(%arg0: i32) -> (i32, i32) {
    %c0_i32 = arith.constant 0 : i32
    %c0_i32_0 = arith.constant 0 : i32
    %c0_i32_1 = arith.constant 0 : i32
    return %c0_i32, %c0_i32_0 : i32, i32
  }
  func.func @transform_11(%arg0: i32) -> (i32, i32) {
    %c0_i32 = arith.constant 0 : i32
    %c0_i32_0 = arith.constant 0 : i32
    %c0_i32_1 = arith.constant 0 : i32
    return %c0_i32, %c0_i32_0 : i32, i32
  }
  func.func @transform_12(%arg0: i32) -> (i32, i32) {
    %c0_i32 = arith.constant 0 : i32
    %c0_i32_0 = arith.constant 0 : i32
    %c0_i32_1 = arith.constant 0 : i32
    return %c0_i32, %c0_i32_0 : i32, i32
  }
  func.func @transform_13(%arg0: i32) -> (i32, i32, i32) {
    %c0_i32 = arith.constant 0 : i32
    %c0_i32_0 = arith.constant 0 : i32
    %c0_i32_1 = arith.constant 0 : i32
    return %arg0, %c0_i32, %c0_i32_0 : i32, i32, i32
  }
}

</mosaic_0001>

<llo_original>
// kernel: model_forward.3
$region0: #{model_forward.3}
  #allocation0 [shape = 'u32[]', space=smem, size = 0x4, offset = 0x4, fixed_abs, tag = 'smem constant byte address 0x4 - core index']
  #allocation1 [shape = 'u32[144,128]{1,0:T(1,128)}', space=vmem, size = 0x12000, scoped, tag = 'internal scratch']
  %s0 = inlined_call_operand.vmem [shape: bf16[16,32], index: 0, kind: input, shape index: {}]
  %s1 = inlined_call_operand.vmem [shape: bf16[32,128], index: 1, kind: input, shape index: {}]
  %s2 = inlined_call_operand.vmem [shape: f32[1,128], index: 2, kind: input, shape index: {}]
  %s3 = inlined_call_operand.hbm [shape: f32[16,128], index: 3, kind: output, shape index: {}]
  %s4 = sld [smem:[#allocation0]]
  $region22: #{model_forward.3} parent=0
    _
  %s6 = ssub.s32 1, %s4
  %s7 = scalar_select 0, %s6, %s4
  $region1: #{model_forward.3} parent=0
    #allocation2 [shape = 'u8[8192]{0}', space=vmem, size = 0x2000, scoped, tag = 'output window, operand 0, single buffered']
    #allocation3 [shape = 's32[1]{0}', space=sflag, size = 0x4, scoped, tag = 'scoped memory for model_forward.3']
    %8 = vsyncpa [#allocation3], 0
    // Predicated region
    $region2: #{model_forward.3} parent=1 // pred_check
      _
    $region3: #{model_forward.3} parent=1 // pred_check_branch
      %10 = sbr.rel (0) target = $region5
    $region4: #{model_forward.3} parent=1 // pred_region
      _
    $region5: #{model_forward.3} parent=1 // pred_fallthru
      _
    // Predicated region
    $region6: #{model_forward.3} parent=1 // pred_check
      _
    $region7: #{model_forward.3} parent=1 // pred_check_branch
      %12 = sbr.rel (0) target = $region9
    $region8: #{model_forward.3} parent=1 // pred_region
      _
    $region9: #{model_forward.3} parent=1 // pred_fallthru
      _
    // Predicated region
    $region10: #{model_forward.3} parent=1 // pred_check
      _
    $region11: #{model_forward.3} parent=1 // pred_check_branch
      %14 = sbr.rel (0) target = $region13
    $region12: #{model_forward.3} parent=1 // pred_region
      _
    $region13: #{model_forward.3} parent=1 // pred_fallthru
      _
    %v16 = vld [vmem:[%s0] sm:$0xf]
    %v17 = vld [vmem:[%s0 + $0x4] sm:$0xf]
    %v18 = vld [vmem:[%s1] sm:$0xf]
    %v19 = vld [vmem:[%s1 + $0x4] sm:$0xf]
    %v20 = vld [vmem:[%s1 + $0x8] sm:$0xf]
    %v21 = vld [vmem:[%s1 + $0xc] sm:$0xf]
    %v22 = vld [vmem:[%s2] sm:$0x1]
    %v24 = vlaneseq
    %v25 = vshrl.u32 %v24, 7
    %v26 = vsub.s32 0, %v25
    %v27 = vrot.slane %v22, %v26
    %v31 = vunpack.c.l.b16 %v16
    %v32 = vunpack.c.l.b16 %v17
    %v33 = vpack.c.b16 %v32, %v31
    %v38 = vunpack.c.l.b16 %v18
    %v39 = vunpack.c.l.b16 %v19
    %v40 = vunpack.c.l.b16 %v20
    %v41 = vunpack.c.l.b16 %v21
    %v42 = vpack.c.b16 %v39, %v38
    %v43 = vpack.c.b16 %v41, %v40
    %vm46 = vcmask 261120
    %v48 = vsel %vm46, %v33, 0
    %50 = vmatprep.subr.bf16.mxu0 0
    %51 = vmatpush1.bf16.msra.mxu0 %v42
    %52 = vmatprep.subr.bf16.mxu0 0
    %53 = vmatpush1.bf16.msra.mxu0 %v43
    %54 = vmatprep.subr.bf16.mxu0 0
    %55 = vmatpush1.bf16.msra.mxu0 0
    %56 = vmatprep.subr.bf16.mxu0 0
    %57 = vmatpush1.bf16.msra.mxu0 0
    %58 = vmatprep.subr.bf16.mxu0 0
    %59 = vmatpush1.bf16.msra.mxu0 0
    %60 = vmatprep.subr.bf16.mxu0 0
    %61 = vmatpush1.bf16.msra.mxu0 0
    %62 = vmatprep.subr.bf16.mxu0 0
    %63 = vmatpush1.bf16.msra.mxu0 0
    %64 = vmatprep.subr.bf16.mxu0 0
    %65 = vmatpush1.bf16.msra.mxu0 0
    %66 = vmatprep.subr.bf16.mxu0 0
    %67 = vmatpush1.bf16.msra.mxu0 0
    %68 = vmatprep.subr.bf16.mxu0 0
    %69 = vmatpush1.bf16.msra.mxu0 0
    %70 = vmatprep.subr.bf16.mxu0 0
    %71 = vmatpush1.bf16.msra.mxu0 0
    %72 = vmatprep.subr.bf16.mxu0 0
    %73 = vmatpush1.bf16.msra.mxu0 0
    %74 = vmatprep.subr.bf16.mxu0 0
    %75 = vmatpush1.bf16.msra.mxu0 0
    %76 = vmatprep.subr.bf16.mxu0 0
    %77 = vmatpush1.bf16.msra.mxu0 0
    %78 = vmatprep.subr.bf16.mxu0 0
    %79 = vmatpush1.bf16.msra.mxu0 0
    %80 = vmatprep.subr.bf16.mxu0 0
    %81 = vmatpush1.bf16.msra.mxu0 0
    %82 = vmatprep.mubr.bf16.mxu0 0
    %83 = vmatmul.mubr.bf16.gmra.mrb[0].mxu0 %v48
    %v84 = vpop.f32.mrb[0].mxu0
    %v85 = vadd.f32 %v27, %v84
    %v86 = vpop.f32.mrb[0].mxu0
    %v87 = vpop.f32.mrb[0].mxu0
    %v88 = vadd.f32 %v27, %v87
    %v89 = vpop.f32.mrb[0].mxu0
    %90 = vdwg.mxu0
    %91 = vst [vmem:[#allocation2] sm:$0xff] %v85
    %92 = vst [vmem:[#allocation2 + $0x8] sm:$0xff] %v88
    // Predicated region
    $region14: #{model_forward.3} parent=1 // pred_check
      _
    $region15: #{model_forward.3} parent=1 // pred_check_branch
      %94 = sbr.rel (0) target = $region17
    $region16: #{model_forward.3} parent=1 // pred_region
      %s96 = ssub.s32 256, 256
      %97 = vsyncadd [#allocation3], %s96
      %s98 = sshll.u32 [#allocation2], 4
      %s99 = int_to_ptr.vmem [resolvable:$true] %s98
      %104 = dma.vmem_to_hbm [thread:$0]  %s99, 256, %s3, [#allocation3], 128, 128, 8
    $region17: #{model_forward.3} parent=1 // pred_fallthru
      _
    // Predicated region
    $region18: #{model_forward.3} parent=1 // pred_check
      _
    $region19: #{model_forward.3} parent=1 // pred_check_branch
      %106 = sbr.rel (0) target = $region21
    $region20: #{model_forward.3} parent=1 // pred_region
      %107 = dma.done [#allocation3], 256
    $region21: #{model_forward.3} parent=1 // pred_fallthru
      _
    %108 = vsyncpa [#allocation3], 1

// kernel: model_forward.2
$region0: #{model_forward.2}
  #allocation0 [shape = 'u32[]', space=smem, size = 0x4, offset = 0x4, fixed_abs, tag = 'smem constant byte address 0x4 - core index']
  #allocation1 [shape = 'u32[144,128]{1,0:T(1,128)}', space=vmem, size = 0x12000, scoped, tag = 'internal scratch']
  %s0 = inlined_call_operand.vmem [shape: f32[8,2,32], index: 0, kind: input, shape index: {}]
  %s1 = inlined_call_operand.vmem [shape: bf16[32,96], index: 1, kind: input, shape index: {}]
  %s2 = inlined_call_operand.vmem [shape: f32[1,96], index: 2, kind: input, shape index: {}]
  %s3 = inlined_call_operand.vmem [shape: bf16[32,32], index: 3, kind: input, shape index: {}]
  %s4 = inlined_call_operand.vmem [shape: f32[1,32], index: 4, kind: input, shape index: {}]
  %s5 = inlined_call_operand.vmem [shape: f32[1,32], index: 5, kind: input, shape index: {}]
  %s6 = inlined_call_operand.vmem [shape: f32[1,32], index: 6, kind: input, shape index: {}]
  %s7 = inlined_call_operand.vmem [shape: bf16[32,64], index: 7, kind: input, shape index: {}]
  %s8 = inlined_call_operand.vmem [shape: f32[1,64], index: 8, kind: input, shape index: {}]
  %s9 = inlined_call_operand.vmem [shape: bf16[64,32], index: 9, kind: input, shape index: {}]
  %s10 = inlined_call_operand.vmem [shape: f32[1,32], index: 10, kind: input, shape index: {}]
  %s11 = inlined_call_operand.vmem [shape: f32[1,32], index: 11, kind: input, shape index: {}]
  %s12 = inlined_call_operand.vmem [shape: f32[1,32], index: 12, kind: input, shape index: {}]
  %s13 = inlined_call_operand.vmem [shape: f32[8,2,32], index: 13, kind: output, shape index: {}]
  %s14 = sld [smem:[#allocation0]]
  $region92: #{model_forward.2} parent=0
    _
  %s16 = ssub.s32 1, %s14
  %s17 = scalar_select 0, %s16, %s14
  loop: start=0, step=1, limit=10
  $region2: #{model_forward.2} parent=0 // loop_pre_header
    _
  $region3: #{model_forward.2} parent=0 // loop_header
    %s19 = sphi 0, %s23
    %p20 = scmp.ge.s32.totalorder %s19, 10
    %s29 = sphi 0, %s31
    %s32 = sphi 0, %s29
    %s33 = sphi 0, %s32
    %s49 = sphi 0, %s33
    %s53 = sphi 0, %s53
    %s55 = sphi 0, %s53
    %s56 = sphi 0, %s55
    %s70 = sphi 0, %s56
    %s74 = sphi 0, %s74
    %s76 = sphi 0, %s74
    %s77 = sphi 0, %s76
    %s91 = sphi 0, %s77
    %s95 = sphi 0, %s95
    %s97 = sphi 0, %s95
    %s98 = sphi 0, %s97
    %s112 = sphi 0, %s98
    %s116 = sphi 0, %s116
    %s118 = sphi 0, %s116
    %s119 = sphi 0, %s118
    %s133 = sphi 0, %s119
    %s137 = sphi 0, %s137
    %s139 = sphi 0, %s137
    %s140 = sphi 0, %s139
    %s154 = sphi 0, %s140
    %s158 = sphi 0, %s158
    %s160 = sphi 0, %s158
    %s161 = sphi 0, %s160
    %s175 = sphi 0, %s161
    %s179 = sphi 0, %s179
    %s181 = sphi 0, %s179
    %s182 = sphi 0, %s181
    %s196 = sphi 0, %s182
    %s200 = sphi 0, %s200
    %s202 = sphi 0, %s200
    %s203 = sphi 0, %s202
    %s217 = sphi 0, %s203
    %s221 = sphi 0, %s221
    %s223 = sphi 0, %s221
    %s224 = sphi 0, %s223
    %s238 = sphi 0, %s224
    %s242 = sphi 0, %s242
    %s244 = sphi 0, %s242
    %s245 = sphi 0, %s244
    %s259 = sphi 0, %s245
    %s263 = sphi 0, %s263
    %s265 = sphi 0, %s263
    %s266 = sphi 0, %s265
    %s280 = sphi 0, %s266
    %s284 = sphi 0, %s284
    %s286 = sphi 0, %s284
    %s287 = sphi 0, %s286
    %s301 = sphi 0, %s287
    %s307 = sphi 0, %s309
    %s310 = sphi 0, %s307
    %s311 = sphi 0, %s310
    %s327 = sphi 0, %s311
  $region4: #{model_forward.2} parent=0 // loop_header_branch
    %22 = sbr.rel (%p20) target = $region8
  $region5: #{model_forward.2} parent=0 // loop_body
    %s24 = ssub.s32 %s19, 1
    %s25 = ssub.s32 %s19, 2
    %s26 = sadd.s32 %s19, 1
    %s27 = ssub.s32 %s19, %s26
    %p28 = scmp.eq.s32.totalorder %s27, 0
    %s30 = sadd.s32 %s29, 1
    %s31 = scalar_select %p28, %s29, %s30
    %p34 = pneg %p28
    %p35 = scmp.eq.s32.totalorder %s19, 7
    %p36 = por %p34, %p35
    %p37 = scmp.ne.s32.totalorder %s29, %s32
    %p38 = scmp.eq.s32.totalorder %s19, 0
    %p39 = por %p37, %p38
    %p40 = scmp.ne.s32.totalorder %s29, %s32
    %p41 = scmp.eq.s32.totalorder %s24, 7
    %p42 = por %p40, %p41
    %p43 = scmp.ne.s32.totalorder %s32, %s33
    %p44 = scmp.eq.s32.totalorder %s24, 0
    %p45 = por %p43, %p44
    %p46 = scmp.ne.s32.totalorder %s32, %s33
    %p47 = scmp.eq.s32.totalorder %s25, 7
    %p48 = por %p46, %p47
    %p50 = scmp.ne.s32.totalorder %s33, %s49
    %p51 = scmp.eq.s32.totalorder %s25, 0
    %p52 = por %p50, %p51
    %s54 = sadd.s32 %s53, 1
    %p57 = scmp.eq.s32.totalorder %s19, 7
    %p58 = scmp.ne.s32.totalorder %s53, %s55
    %p59 = scmp.eq.s32.totalorder %s19, 0
    %p60 = por %p58, %p59
    %p61 = scmp.ne.s32.totalorder %s53, %s55
    %p62 = scmp.eq.s32.totalorder %s24, 7
    %p63 = por %p61, %p62
    %p64 = scmp.ne.s32.totalorder %s55, %s56
    %p65 = scmp.eq.s32.totalorder %s24, 0
    %p66 = por %p64, %p65
    %p67 = scmp.ne.s32.totalorder %s55, %s56
    %p68 = scmp.eq.s32.totalorder %s25, 7
    %p69 = por %p67, %p68
    %p71 = scmp.ne.s32.totalorder %s56, %s70
    %p72 = scmp.eq.s32.totalorder %s25, 0
    %p73 = por %p71, %p72
    %s75 = sadd.s32 %s74, 1
    %p78 = scmp.eq.s32.totalorder %s19, 7
    %p79 = scmp.ne.s32.totalorder %s74, %s76
    %p80 = scmp.eq.s32.totalorder %s19, 0
    %p81 = por %p79, %p80
    %p82 = scmp.ne.s32.totalorder %s74, %s76
    %p83 = scmp.eq.s32.totalorder %s24, 7
    %p84 = por %p82, %p83
    %p85 = scmp.ne.s32.totalorder %s76, %s77
    %p86 = scmp.eq.s32.totalorder %s24, 0
    %p87 = por %p85, %p86
    %p88 = scmp.ne.s32.totalorder %s76, %s77
    %p89 = scmp.eq.s32.totalorder %s25, 7
    %p90 = por %p88, %p89
    %p92 = scmp.ne.s32.totalorder %s77, %s91
    %p93 = scmp.eq.s32.totalorder %s25, 0
    %p94 = por %p92, %p93
    %s96 = sadd.s32 %s95, 1
    %p99 = scmp.eq.s32.totalorder %s19, 7
    %p100 = scmp.ne.s32.totalorder %s95, %s97
    %p101 = scmp.eq.s32.totalorder %s19, 0
    %p102 = por %p100, %p101
    %p103 = scmp.ne.s32.totalorder %s95, %s97
    %p104 = scmp.eq.s32.totalorder %s24, 7
    %p105 = por %p103, %p104
    %p106 = scmp.ne.s32.totalorder %s97, %s98
    %p107 = scmp.eq.s32.totalorder %s24, 0
    %p108 = por %p106, %p107
    %p109 = scmp.ne.s32.totalorder %s97, %s98
    %p110 = scmp.eq.s32.totalorder %s25, 7
    %p111 = por %p109, %p110
    %p113 = scmp.ne.s32.totalorder %s98, %s112
    %p114 = scmp.eq.s32.totalorder %s25, 0
    %p115 = por %p113, %p114
    %s117 = sadd.s32 %s116, 1
    %p120 = scmp.eq.s32.totalorder %s19, 7
    %p121 = scmp.ne.s32.totalorder %s116, %s118
    %p122 = scmp.eq.s32.totalorder %s19, 0
    %p123 = por %p121, %p122
    %p124 = scmp.ne.s32.totalorder %s116, %s118
    %p125 = scmp.eq.s32.totalorder %s24, 7
    %p126 = por %p124, %p125
    %p127 = scmp.ne.s32.totalorder %s118, %s119
    %p128 = scmp.eq.s32.totalorder %s24, 0
    %p129 = por %p127, %p128
    %p130 = scmp.ne.s32.totalorder %s118, %s119
    %p131 = scmp.eq.s32.totalorder %s25, 7
    %p132 = por %p130, %p131
    %p134 = scmp.ne.s32.totalorder %s119, %s133
    %p135 = scmp.eq.s32.totalorder %s25, 0
    %p136 = por %p134, %p135
    %s138 = sadd.s32 %s137, 1
    %p141 = scmp.eq.s32.totalorder %s19, 7
    %p142 = scmp.ne.s32.totalorder %s137, %s139
    %p143 = scmp.eq.s32.totalorder %s19, 0
    %p144 = por %p142, %p143
    %p145 = scmp.ne.s32.totalorder %s137, %s139
    %p146 = scmp.eq.s32.totalorder %s24, 7
    %p147 = por %p145, %p146
    %p148 = scmp.ne.s32.totalorder %s139, %s140
    %p149 = scmp.eq.s32.totalorder %s24, 0
    %p150 = por %p148, %p149
    %p151 = scmp.ne.s32.totalorder %s139, %s140
    %p152 = scmp.eq.s32.totalorder %s25, 7
    %p153 = por %p151, %p152
    %p155 = scmp.ne.s32.totalorder %s140, %s154
    %p156 = scmp.eq.s32.totalorder %s25, 0
    %p157 = por %p155, %p156
    %s159 = sadd.s32 %s158, 1
    %p162 = scmp.eq.s32.totalorder %s19, 7
    %p163 = scmp.ne.s32.totalorder %s158, %s160
    %p164 = scmp.eq.s32.totalorder %s19, 0
    %p165 = por %p163, %p164
    %p166 = scmp.ne.s32.totalorder %s158, %s160
    %p167 = scmp.eq.s32.totalorder %s24, 7
    %p168 = por %p166, %p167
    %p169 = scmp.ne.s32.totalorder %s160, %s161
    %p170 = scmp.eq.s32.totalorder %s24, 0
    %p171 = por %p169, %p170
    %p172 = scmp.ne.s32.totalorder %s160, %s161
    %p173 = scmp.eq.s32.totalorder %s25, 7
    %p174 = por %p172, %p173
    %p176 = scmp.ne.s32.totalorder %s161, %s175
    %p177 = scmp.eq.s32.totalorder %s25, 0
    %p178 = por %p176, %p177
    %s180 = sadd.s32 %s179, 1
    %p183 = scmp.eq.s32.totalorder %s19, 7
    %p184 = scmp.ne.s32.totalorder %s179, %s181
    %p185 = scmp.eq.s32.totalorder %s19, 0
    %p186 = por %p184, %p185
    %p187 = scmp.ne.s32.totalorder %s179, %s181
    %p188 = scmp.eq.s32.totalorder %s24, 7
    %p189 = por %p187, %p188
    %p190 = scmp.ne.s32.totalorder %s181, %s182
    %p191 = scmp.eq.s32.totalorder %s24, 0
    %p192 = por %p190, %p191
    %p193 = scmp.ne.s32.totalorder %s181, %s182
    %p194 = scmp.eq.s32.totalorder %s25, 7
    %p195 = por %p193, %p194
    %p197 = scmp.ne.s32.totalorder %s182, %s196
    %p198 = scmp.eq.s32.totalorder %s25, 0
    %p199 = por %p197, %p198
    %s201 = sadd.s32 %s200, 1
    %p204 = scmp.eq.s32.totalorder %s19, 7
    %p205 = scmp.ne.s32.totalorder %s200, %s202
    %p206 = scmp.eq.s32.totalorder %s19, 0
    %p207 = por %p205, %p206
    %p208 = scmp.ne.s32.totalorder %s200, %s202
    %p209 = scmp.eq.s32.totalorder %s24, 7
    %p210 = por %p208, %p209
    %p211 = scmp.ne.s32.totalorder %s202, %s203
    %p212 = scmp.eq.s32.totalorder %s24, 0
    %p213 = por %p211, %p212
    %p214 = scmp.ne.s32.totalorder %s202, %s203
    %p215 = scmp.eq.s32.totalorder %s25, 7
    %p216 = por %p214, %p215
    %p218 = scmp.ne.s32.totalorder %s203, %s217
    %p219 = scmp.eq.s32.totalorder %s25, 0
    %p220 = por %p218, %p219
    %s222 = sadd.s32 %s221, 1
    %p225 = scmp.eq.s32.totalorder %s19, 7
    %p226 = scmp.ne.s32.totalorder %s221, %s223
    %p227 = scmp.eq.s32.totalorder %s19, 0
    %p228 = por %p226, %p227
    %p229 = scmp.ne.s32.totalorder %s221, %s223
    %p230 = scmp.eq.s32.totalorder %s24, 7
    %p231 = por %p229, %p230
    %p232 = scmp.ne.s32.totalorder %s223, %s224
    %p233 = scmp.eq.s32.totalorder %s24, 0
    %p234 = por %p232, %p233
    %p235 = scmp.ne.s32.totalorder %s223, %s224
    %p236 = scmp.eq.s32.totalorder %s25, 7
    %p237 = por %p235, %p236
    %p239 = scmp.ne.s32.totalorder %s224, %s238
    %p240 = scmp.eq.s32.totalorder %s25, 0
    %p241 = por %p239, %p240
    %s243 = sadd.s32 %s242, 1
    %p246 = scmp.eq.s32.totalorder %s19, 7
    %p247 = scmp.ne.s32.totalorder %s242, %s244
    %p248 = scmp.eq.s32.totalorder %s19, 0
    %p249 = por %p247, %p248
    %p250 = scmp.ne.s32.totalorder %s242, %s244
    %p251 = scmp.eq.s32.totalorder %s24, 7
    %p252 = por %p250, %p251
    %p253 = scmp.ne.s32.totalorder %s244, %s245
    %p254 = scmp.eq.s32.totalorder %s24, 0
    %p255 = por %p253, %p254
    %p256 = scmp.ne.s32.totalorder %s244, %s245
    %p257 = scmp.eq.s32.totalorder %s25, 7
    %p258 = por %p256, %p257
    %p260 = scmp.ne.s32.totalorder %s245, %s259
    %p261 = scmp.eq.s32.totalorder %s25, 0
    %p262 = por %p260, %p261
    %s264 = sadd.s32 %s263, 1
    %p267 = scmp.eq.s32.totalorder %s19, 7
    %p268 = scmp.ne.s32.totalorder %s263, %s265
    %p269 = scmp.eq.s32.totalorder %s19, 0
    %p270 = por %p268, %p269
    %p271 = scmp.ne.s32.totalorder %s263, %s265
    %p272 = scmp.eq.s32.totalorder %s24, 7
    %p273 = por %p271, %p272
    %p274 = scmp.ne.s32.totalorder %s265, %s266
    %p275 = scmp.eq.s32.totalorder %s24, 0
    %p276 = por %p274, %p275
    %p277 = scmp.ne.s32.totalorder %s265, %s266
    %p278 = scmp.eq.s32.totalorder %s25, 7
    %p279 = por %p277, %p278
    %p281 = scmp.ne.s32.totalorder %s266, %s280
    %p282 = scmp.eq.s32.totalorder %s25, 0
    %p283 = por %p281, %p282
    %s285 = sadd.s32 %s284, 1
    %p288 = scmp.eq.s32.totalorder %s19, 7
    %p289 = scmp.ne.s32.totalorder %s284, %s286
    %p290 = scmp.eq.s32.totalorder %s19, 0
    %p291 = por %p289, %p290
    %p292 = scmp.ne.s32.totalorder %s284, %s286
    %p293 = scmp.eq.s32.totalorder %s24, 7
    %p294 = por %p292, %p293
    %p295 = scmp.ne.s32.totalorder %s286, %s287
    %p296 = scmp.eq.s32.totalorder %s24, 0
    %p297 = por %p295, %p296
    %p298 = scmp.ne.s32.totalorder %s286, %s287
    %p299 = scmp.eq.s32.totalorder %s25, 7
    %p300 = por %p298, %p299
    %p302 = scmp.ne.s32.totalorder %s287, %s301
    %p303 = scmp.eq.s32.totalorder %s25, 0
    %p304 = por %p302, %p303
    %s305 = ssub.s32 %s19, %s26
    %p306 = scmp.eq.s32.totalorder %s305, 0
    %s308 = sadd.s32 %s307, 1
    %s309 = scalar_select %p306, %s307, %s308
    %p312 = pneg %p306
    %p313 = scmp.eq.s32.totalorder %s19, 7
    %p314 = por %p312, %p313
    %p315 = scmp.ne.s32.totalorder %s307, %s310
    %p316 = scmp.eq.s32.totalorder %s19, 0
    %p317 = por %p315, %p316
    %p318 = scmp.ne.s32.totalorder %s307, %s310
    %p319 = scmp.eq.s32.totalorder %s24, 7
    %p320 = por %p318, %p319
    %p321 = scmp.ne.s32.totalorder %s310, %s311
    %p322 = scmp.eq.s32.totalorder %s24, 0
    %p323 = por %p321, %p322
    %p324 = scmp.ne.s32.totalorder %s310, %s311
    %p325 = scmp.eq.s32.totalorder %s25, 7
    %p326 = por %p324, %p325
    %p328 = scmp.ne.s32.totalorder %s311, %s327
    %p329 = scmp.eq.s32.totalorder %s25, 0
    %p330 = por %p328, %p329
    %p331 = scmp.le.s32.totalorder 1, %s19
    %p332 = scmp.lt.s32.totalorder %s19, 9
    %p333 = pnand %p331, %p332
    %p334 = pneg %p333
    // Predicated region
    $region9: #{model_forward.2} parent=5 // pred_check
      _
    $region10: #{model_forward.2} parent=5 // pred_check_branch
      %336 = sbr.rel (%p333) target = $region12
    $region11: #{model_forward.2} parent=5 // pred_region
      %s337 = ssub.s32 %s19, 1
      // Predicated region
      $region13: #{model_forward.2} parent=11 // pred_check
        %p338 = pneg %p66
      $region14: #{model_forward.2} parent=11 // pred_check_branch
        %340 = sbr.rel (%p338) target = $region16
      $region15: #{model_forward.2} parent=11 // pred_region
        _
      $region16: #{model_forward.2} parent=11 // pred_fallthru
        _
      // Predicated region
      $region17: #{model_forward.2} parent=11 // pred_check
        %p341 = pneg %p87
      $region18: #{model_forward.2} parent=11 // pred_check_branch
        %343 = sbr.rel (%p341) target = $region20
      $region19: #{model_forward.2} parent=11 // pred_region
        _
      $region20: #{model_forward.2} parent=11 // pred_fallthru
        _
      // Predicated region
      $region21: #{model_forward.2} parent=11 // pred_check
        %p344 = pneg %p108
      $region22: #{model_forward.2} parent=11 // pred_check_branch
        %346 = sbr.rel (%p344) target = $region24
      $region23: #{model_forward.2} parent=11 // pred_region
        _
      $region24: #{model_forward.2} parent=11 // pred_fallthru
        _
      // Predicated region
      $region25: #{model_forward.2} parent=11 // pred_check
        %p347 = pneg %p129
      $region26: #{model_forward.2} parent=11 // pred_check_branch
        %349 = sbr.rel (%p347) target = $region28
      $region27: #{model_forward.2} parent=11 // pred_region
        _
      $region28: #{model_forward.2} parent=11 // pred_fallthru
        _
      // Predicated region
      $region29: #{model_forward.2} parent=11 // pred_check
        %p350 = pneg %p150
      $region30: #{model_forward.2} parent=11 // pred_check_branch
        %352 = sbr.rel (%p350) target = $region32
      $region31: #{model_forward.2} parent=11 // pred_region
        _
      $region32: #{model_forward.2} parent=11 // pred_fallthru
        _
      // Predicated region
      $region33: #{model_forward.2} parent=11 // pred_check
        %p353 = pneg %p171
      $region34: #{model_forward.2} parent=11 // pred_check_branch
        %355 = sbr.rel (%p353) target = $region36
      $region35: #{model_forward.2} parent=11 // pred_region
        _
      $region36: #{model_forward.2} parent=11 // pred_fallthru
        _
      // Predicated region
      $region37: #{model_forward.2} parent=11 // pred_check
        %p356 = pneg %p192
      $region38: #{model_forward.2} parent=11 // pred_check_branch
        %358 = sbr.rel (%p356) target = $region40
      $region39: #{model_forward.2} parent=11 // pred_region
        _
      $region40: #{model_forward.2} parent=11 // pred_fallthru
        _
      // Predicated region
      $region41: #{model_forward.2} parent=11 // pred_check
        %p359 = pneg %p213
      $region42: #{model_forward.2} parent=11 // pred_check_branch
        %361 = sbr.rel (%p359) target = $region44
      $region43: #{model_forward.2} parent=11 // pred_region
        _
      $region44: #{model_forward.2} parent=11 // pred_fallthru
        _
      // Predicated region
      $region45: #{model_forward.2} parent=11 // pred_check
        %p362 = pneg %p234
      $region46: #{model_forward.2} parent=11 // pred_check_branch
        %364 = sbr.rel (%p362) target = $region48
      $region47: #{model_forward.2} parent=11 // pred_region
        _
      $region48: #{model_forward.2} parent=11 // pred_fallthru
        _
      // Predicated region
      $region49: #{model_forward.2} parent=11 // pred_check
        %p365 = pneg %p255
      $region50: #{model_forward.2} parent=11 // pred_check_branch
        %367 = sbr.rel (%p365) target = $region52
      $region51: #{model_forward.2} parent=11 // pred_region
        _
      $region52: #{model_forward.2} parent=11 // pred_fallthru
        _
      // Predicated region
      $region53: #{model_forward.2} parent=11 // pred_check
        %p368 = pneg %p276
      $region54: #{model_forward.2} parent=11 // pred_check_branch
        %370 = sbr.rel (%p368) target = $region56
      $region55: #{model_forward.2} parent=11 // pred_region
        _
      $region56: #{model_forward.2} parent=11 // pred_fallthru
        _
      // Predicated region
      $region57: #{model_forward.2} parent=11 // pred_check
        %p371 = pneg %p297
      $region58: #{model_forward.2} parent=11 // pred_check_branch
        %373 = sbr.rel (%p371) target = $region60
      $region59: #{model_forward.2} parent=11 // pred_region
        _
      $region60: #{model_forward.2} parent=11 // pred_fallthru
        _
    $region12: #{model_forward.2} parent=5 // pred_fallthru
      _
    %p374 = scmp.lt.s32.totalorder %s19, 8
    // Predicated region
    $region61: #{model_forward.2} parent=5 // pred_check
      %p375 = pneg %p374
    $region62: #{model_forward.2} parent=5 // pred_check_branch
      %377 = sbr.rel (%p375) target = $region64
    $region63: #{model_forward.2} parent=5 // pred_region
      // Predicated region
      $region65: #{model_forward.2} parent=63 // pred_check
        %p378 = pneg %p39
      $region66: #{model_forward.2} parent=63 // pred_check_branch
        %380 = sbr.rel (%p378) target = $region68
      $region67: #{model_forward.2} parent=63 // pred_region
        %p381 = scmp.lt.s32.totalorder %s19, 7
        %s382 = scalar_select %p381, %s19, 7
        %s383 = smul.addr %s382, 2
        %s384 = scalar_lea.vmem %s0, %s383
      $region68: #{model_forward.2} parent=63 // pred_fallthru
        _
    $region64: #{model_forward.2} parent=5 // pred_fallthru
      _
    %p385 = scmp.le.s32.totalorder 1, %s19
    %p386 = scmp.lt.s32.totalorder %s19, 9
    %p387 = pnand %p385, %p386
    %p388 = pneg %p387
    // Predicated region
    $region69: #{model_forward.2} parent=5 // pred_check
      _
    $region70: #{model_forward.2} parent=5 // pred_check_branch
      %390 = sbr.rel (%p387) target = $region72
    $region71: #{model_forward.2} parent=5 // pred_region
      %s391 = ssub.s32 %s19, 1
      %p392 = scmp.lt.s32.totalorder %s24, 7
      %s393 = scalar_select %p392, %s24, 7
      %s394 = smul.addr %s393, 2
      %s395 = scalar_lea.vmem %s0, %s394
      %p396 = pneg %p45
      %p397 = pneg %p42
      %p398 = pneg %p66
      %p399 = pneg %p63
      %p400 = pneg %p87
      %p401 = pneg %p84
      %p402 = pneg %p108
      %p403 = pneg %p105
      %p404 = pneg %p129
      %p405 = pneg %p126
      %p406 = pneg %p150
      %p407 = pneg %p147
      %p408 = pneg %p171
      %p409 = pneg %p168
      %p410 = pneg %p192
      %p411 = pneg %p189
      %p412 = pneg %p213
      %p413 = pneg %p210
      %p414 = pneg %p234
      %p415 = pneg %p231
      %p416 = pneg %p255
      %p417 = pneg %p252
      %p418 = pneg %p276
      %p419 = pneg %p273
      %p420 = pneg %p297
      %p421 = pneg %p294
      %p422 = pneg %p323
      %p423 = pneg %p320
      %p424 = scmp.lt.s32.totalorder %s24, 7
      %s425 = scalar_select %p424, %s24, 7
      %s426 = smul.addr %s425, 2
      %s427 = scalar_lea.vmem %s13, %s426
      %p428 = scmp.lt.s32.totalorder %s24, 7
      %s429 = scalar_select %p428, %s24, 7
      %s430 = smul.addr %s429, 2
      %s431 = scalar_lea.vmem %s0, %s430
      %p432 = scmp.lt.s32.totalorder %s24, 7
      %s433 = scalar_select %p432, %s24, 7
      %s434 = smul.addr %s433, 2
      %s435 = scalar_lea.vmem %s13, %s434
      %v437 = vld [vmem:[%s431] sm:$0x3]
      loop: start=0, step=1, limit=2
      $region73: #{model_forward.2} parent=71 // loop_pre_header
        _
      $region74: #{model_forward.2} parent=71 // loop_header
        %s439 = sphi 0, %s443
        %p440 = scmp.ge.s32.totalorder %s439, 2
        %v444 = vphi %v437, %v1378
      $region75: #{model_forward.2} parent=71 // loop_header_branch
        %442 = sbr.rel (%p440) target = $region79
      $region76: #{model_forward.2} parent=71 // loop_body
        %v445 = vpack.c.bf16 %v444, %v444
        %v446 = vld [vmem:[%s1] sm:$0xf]
        %v447 = vld [vmem:[%s1 + $0x4] sm:$0xf]
        %v448 = vld [vmem:[%s1 + $0x8] sm:$0xf]
        %v449 = vld [vmem:[%s1 + $0xc] sm:$0xf]
        %v450 = vld [vmem:[%s2] sm:$0x1]
        %v452 = vlaneseq
        %v453 = vshrl.u32 %v452, 7
        %v454 = vsub.s32 0, %v453
        %v455 = vrot.slane %v450, %v454
        %v461 = vunpack.c.l.b16 %v446
        %v462 = vunpack.c.l.b16 %v447
        %v463 = vunpack.c.l.b16 %v448
        %v464 = vunpack.c.l.b16 %v449
        %v465 = vpack.c.b16 %v462, %v461
        %v466 = vpack.c.b16 %v464, %v463
        %vm469 = vcmask 261120
        %v471 = vsel %vm469, %v445, 0
        %473 = vmatprep.subr.bf16.mxu0 0
        %474 = vmatpush1.bf16.msra.mxu0 %v465
        %475 = vmatprep.subr.bf16.mxu0 0
        %476 = vmatpush1.bf16.msra.mxu0 %v466
        %477 = vmatprep.subr.bf16.mxu0 0
        %478 = vmatpush1.bf16.msra.mxu0 0
        %479 = vmatprep.subr.bf16.mxu0 0
        %480 = vmatpush1.bf16.msra.mxu0 0
        %481 = vmatprep.subr.bf16.mxu0 0
        %482 = vmatpush1.bf16.msra.mxu0 0
        %483 = vmatprep.subr.bf16.mxu0 0
        %484 = vmatpush1.bf16.msra.mxu0 0
        %485 = vmatprep.subr.bf16.mxu0 0
        %486 = vmatpush1.bf16.msra.mxu0 0
        %487 = vmatprep.subr.bf16.mxu0 0
        %488 = vmatpush1.bf16.msra.mxu0 0
        %489 = vmatprep.subr.bf16.mxu0 0
        %490 = vmatpush1.bf16.msra.mxu0 0
        %491 = vmatprep.subr.bf16.mxu0 0
        %492 = vmatpush1.bf16.msra.mxu0 0
        %493 = vmatprep.subr.bf16.mxu0 0
        %494 = vmatpush1.bf16.msra.mxu0 0
        %495 = vmatprep.subr.bf16.mxu0 0
        %496 = vmatpush1.bf16.msra.mxu0 0
        %497 = vmatprep.subr.bf16.mxu0 0
        %498 = vmatpush1.bf16.msra.mxu0 0
        %499 = vmatprep.subr.bf16.mxu0 0
        %500 = vmatpush1.bf16.msra.mxu0 0
        %501 = vmatprep.subr.bf16.mxu0 0
        %502 = vmatpush1.bf16.msra.mxu0 0
        %503 = vmatprep.subr.bf16.mxu0 0
        %504 = vmatpush1.bf16.msra.mxu0 0
        %505 = vmatprep.mubr.bf16.mxu0 0
        %506 = vmatmul.mubr.bf16.gmra.mrb[0].mxu0 %v471
        %v507 = vpop.f32.mrb[0].mxu0
        %v508 = vadd.f32 %v455, %v507
        %v509 = vpop.f32.mrb[0].mxu0
        %v510 = vpop.f32.mrb[0].mxu0
        %v511 = vpop.f32.mrb[0].mxu0
        %512 = vdwg.mxu0
        %v513 = vld [vmem:[%s4] sm:$0x1]
        %v514 = vpack.c.bf16 %v508, %v508
        %516 = vrot.lane.b32.xlu0 %v514, 96
        %v517 = vpop.permute.xlu0 %516
        %vm518 = vcmask 64512
        %v520 = vsel %vm518, %v514, 0
        %v523 = vsel %vm518, %v517, 0
        %525 = vmatprep.subr.bf16.mxu0 0
        %526 = vmatpush1.bf16.xpose.msra.mxu0 %v523
        %527 = vmatprep.subr.bf16.mxu0 0
        %528 = vmatpush1.bf16.xpose.msra.mxu0 0
        %529 = vmatprep.subr.bf16.mxu0 0
        %530 = vmatpush1.bf16.xpose.msra.mxu0 0
        %531 = vmatprep.subr.bf16.mxu0 0
        %532 = vmatpush1.bf16.xpose.msra.mxu0 0
        %533 = vmatprep.subr.bf16.mxu0 0
        %534 = vmatpush1.bf16.xpose.msra.mxu0 0
        %535 = vmatprep.subr.bf16.mxu0 0
        %536 = vmatpush1.bf16.xpose.msra.mxu0 0
        %537 = vmatprep.subr.bf16.mxu0 0
        %538 = vmatpush1.bf16.xpose.msra.mxu0 0
        %539 = vmatprep.subr.bf16.mxu0 0
        %540 = vmatpush1.bf16.xpose.msra.mxu0 0
        %541 = vmatprep.subr.bf16.mxu0 0
        %542 = vmatpush1.bf16.xpose.msra.mxu0 0
        %543 = vmatprep.subr.bf16.mxu0 0
        %544 = vmatpush1.bf16.xpose.msra.mxu0 0
        %545 = vmatprep.subr.bf16.mxu0 0
        %546 = vmatpush1.bf16.xpose.msra.mxu0 0
        %547 = vmatprep.subr.bf16.mxu0 0
        %548 = vmatpush1.bf16.xpose.msra.mxu0 0
        %549 = vmatprep.subr.bf16.mxu0 0
        %550 = vmatpush1.bf16.xpose.msra.mxu0 0
        %551 = vmatprep.subr.bf16.mxu0 0
        %552 = vmatpush1.bf16.xpose.msra.mxu0 0
        %553 = vmatprep.subr.bf16.mxu0 0
        %554 = vmatpush1.bf16.xpose.msra.mxu0 0
        %555 = vmatprep.subr.bf16.mxu0 0
        %556 = vmatpush1.bf16.xpose.msra.mxu0 0
        %557 = vmatprep.mubr.bf16.mxu0 0
        %558 = vmatmul.mubr.bf16.gmra.mrb[0].mxu0 %v520
        %v559 = vpop.f32.mrb[0].mxu0
        %v560 = vadd.f32 0.0, %v559
        %v561 = vpop.f32.mrb[0].mxu0
        %v562 = vpop.f32.mrb[0].mxu0
        %v563 = vpop.f32.mrb[0].mxu0
        %564 = vdwg.mxu0
        %v565 = vmul.f32 %v560, 0.35355338
        %vm566 = vcmask 9216
        %v567 = vsel %vm566, %v565, -inf
        %568 = vmax.xlane.f32.xlu0 %v567
        %v569 = vpop.xlane.xlu0 %568
        %v570 = vsub.f32 %v565, %v569
        %v571 = vmul.f32 %v570, 1.442695
        %v572 = vpow.pop %v571
        %v573 = vsel %vm566, %v572, 0.0
        %574 = vadd.xlane.f32.xlu0 %v573
        %v575 = vpop.xlane.xlu0 %574
        %v576 = vrcp.pop %v575
        %v577 = vmul.f32 %v572, %v576
        %v578 = vpack.c.bf16 %v577, %v577
        %579 = vrot.lane.b32.xlu0 %v514, 64
        %v580 = vpop.permute.xlu0 %579
        %vm581 = vcmask 15360
        %v583 = vsel %vm581, %v578, 0
        %vm585 = vcmask 1040384
        %v587 = vsel %vm585, %v580, 0
        %589 = vmatprep.subr.bf16.mxu0 0
        %590 = vmatpush1.bf16.msra.mxu0 %v587
        %591 = vmatprep.subr.bf16.mxu0 0
        %592 = vmatpush1.bf16.msra.mxu0 0
        %593 = vmatprep.subr.bf16.mxu0 0
        %594 = vmatpush1.bf16.msra.mxu0 0
        %595 = vmatprep.subr.bf16.mxu0 0
        %596 = vmatpush1.bf16.msra.mxu0 0
        %597 = vmatprep.subr.bf16.mxu0 0
        %598 = vmatpush1.bf16.msra.mxu0 0
        %599 = vmatprep.subr.bf16.mxu0 0
        %600 = vmatpush1.bf16.msra.mxu0 0
        %601 = vmatprep.subr.bf16.mxu0 0
        %602 = vmatpush1.bf16.msra.mxu0 0
        %603 = vmatprep.subr.bf16.mxu0 0
        %604 = vmatpush1.bf16.msra.mxu0 0
        %605 = vmatprep.subr.bf16.mxu0 0
        %606 = vmatpush1.bf16.msra.mxu0 0
        %607 = vmatprep.subr.bf16.mxu0 0
        %608 = vmatpush1.bf16.msra.mxu0 0
        %609 = vmatprep.subr.bf16.mxu0 0
        %610 = vmatpush1.bf16.msra.mxu0 0
        %611 = vmatprep.subr.bf16.mxu0 0
        %612 = vmatpush1.bf16.msra.mxu0 0
        %613 = vmatprep.subr.bf16.mxu0 0
        %614 = vmatpush1.bf16.msra.mxu0 0
        %615 = vmatprep.subr.bf16.mxu0 0
        %616 = vmatpush1.bf16.msra.mxu0 0
        %617 = vmatprep.subr.bf16.mxu0 0
        %618 = vmatpush1.bf16.msra.mxu0 0
        %619 = vmatprep.subr.bf16.mxu0 0
        %620 = vmatpush1.bf16.msra.mxu0 0
        %621 = vmatprep.mubr.bf16.mxu0 0
        %622 = vmatmul.mubr.bf16.gmra.mrb[0].mxu0 %v583
        %v623 = vpop.f32.mrb[0].mxu0
        %v624 = vadd.f32 0.0, %v623
        %v625 = vpop.f32.mrb[0].mxu0
        %v626 = vpop.f32.mrb[0].mxu0
        %v627 = vpop.f32.mrb[0].mxu0
        %628 = vdwg.mxu0
        %v629 = vpack.c.bf16 %v624, %v624
        %v630 = vld [vmem:[%s3] sm:$0xf]
        %v632 = vsel %vm518, %v629, 0
        %vm634 = vcmask 1043456
        %v636 = vsel %vm634, %v630, 0
        %638 = vmatprep.subr.bf16.mxu0 0
        %639 = vmatpush1.bf16.msra.mxu0 %v636
        %640 = vmatprep.subr.bf16.mxu0 0
        %641 = vmatpush1.bf16.msra.mxu0 0
        %642 = vmatprep.subr.bf16.mxu0 0
        %643 = vmatpush1.bf16.msra.mxu0 0
        %644 = vmatprep.subr.bf16.mxu0 0
        %645 = vmatpush1.bf16.msra.mxu0 0
        %646 = vmatprep.subr.bf16.mxu0 0
        %647 = vmatpush1.bf16.msra.mxu0 0
        %648 = vmatprep.subr.bf16.mxu0 0
        %649 = vmatpush1.bf16.msra.mxu0 0
        %650 = vmatprep.subr.bf16.mxu0 0
        %651 = vmatpush1.bf16.msra.mxu0 0
        %652 = vmatprep.subr.bf16.mxu0 0
        %653 = vmatpush1.bf16.msra.mxu0 0
        %654 = vmatprep.subr.bf16.mxu0 0
        %655 = vmatpush1.bf16.msra.mxu0 0
        %656 = vmatprep.subr.bf16.mxu0 0
        %657 = vmatpush1.bf16.msra.mxu0 0
        %658 = vmatprep.subr.bf16.mxu0 0
        %659 = vmatpush1.bf16.msra.mxu0 0
        %660 = vmatprep.subr.bf16.mxu0 0
        %661 = vmatpush1.bf16.msra.mxu0 0
        %662 = vmatprep.subr.bf16.mxu0 0
        %663 = vmatpush1.bf16.msra.mxu0 0
        %664 = vmatprep.subr.bf16.mxu0 0
        %665 = vmatpush1.bf16.msra.mxu0 0
        %666 = vmatprep.subr.bf16.mxu0 0
        %667 = vmatpush1.bf16.msra.mxu0 0
        %668 = vmatprep.subr.bf16.mxu0 0
        %669 = vmatpush1.bf16.msra.mxu0 0
        %670 = vmatprep.mubr.bf16.mxu0 0
        %671 = vmatmul.mubr.bf16.gmra.mrb[0].mxu0 %v632
        %v672 = vpop.f32.mrb[0].mxu0
        %v673 = vadd.f32 0.0, %v672
        %v674 = vpop.f32.mrb[0].mxu0
        %v675 = vpop.f32.mrb[0].mxu0
        %v676 = vpop.f32.mrb[0].mxu0
        %677 = vdwg.mxu0
        %v679 = vlaneseq
        %v680 = vshrl.u32 %v679, 7
        %v681 = vsub.s32 0, %v680
        %v682 = vrot.slane %v513, %v681
        %v684 = vadd.f32 %v682, %v673
        %685 = vrot.lane.b32.xlu0 %v514, 120
        %v686 = vpop.permute.xlu0 %685
        %687 = vrot.lane.b32.xlu0 %v514, 88
        %v688 = vpop.permute.xlu0 %687
        %v690 = vsel %vm518, %v686, 0
        %v693 = vsel %vm518, %v688, 0
        %695 = vmatprep.subr.bf16.mxu0 0
        %696 = vmatpush1.bf16.xpose.msra.mxu0 %v693
        %697 = vmatprep.subr.bf16.mxu0 0
        %698 = vmatpush1.bf16.xpose.msra.mxu0 0
        %699 = vmatprep.subr.bf16.mxu0 0
        %700 = vmatpush1.bf16.xpose.msra.mxu0 0
        %701 = vmatprep.subr.bf16.mxu0 0
        %702 = vmatpush1.bf16.xpose.msra.mxu0 0
        %703 = vmatprep.subr.bf16.mxu0 0
        %704 = vmatpush1.bf16.xpose.msra.mxu0 0
        %705 = vmatprep.subr.bf16.mxu0 0
        %706 = vmatpush1.bf16.xpose.msra.mxu0 0
        %707 = vmatprep.subr.bf16.mxu0 0
        %708 = vmatpush1.bf16.xpose.msra.mxu0 0
        %709 = vmatprep.subr.bf16.mxu0 0
        %710 = vmatpush1.bf16.xpose.msra.mxu0 0
        %711 = vmatprep.subr.bf16.mxu0 0
        %712 = vmatpush1.bf16.xpose.msra.mxu0 0
        %713 = vmatprep.subr.bf16.mxu0 0
        %714 = vmatpush1.bf16.xpose.msra.mxu0 0
        %715 = vmatprep.subr.bf16.mxu0 0
        %716 = vmatpush1.bf16.xpose.msra.mxu0 0
        %717 = vmatprep.subr.bf16.mxu0 0
        %718 = vmatpush1.bf16.xpose.msra.mxu0 0
        %719 = vmatprep.subr.bf16.mxu0 0
        %720 = vmatpush1.bf16.xpose.msra.mxu0 0
        %721 = vmatprep.subr.bf16.mxu0 0
        %722 = vmatpush1.bf16.xpose.msra.mxu0 0
        %723 = vmatprep.subr.bf16.mxu0 0
        %724 = vmatpush1.bf16.xpose.msra.mxu0 0
        %725 = vmatprep.subr.bf16.mxu0 0
        %726 = vmatpush1.bf16.xpose.msra.mxu0 0
        %727 = vmatprep.mubr.bf16.mxu0 0
        %728 = vmatmul.mubr.bf16.gmra.mrb[0].mxu0 %v690
        %v729 = vpop.f32.mrb[0].mxu0
        %v730 = vadd.f32 0.0, %v729
        %v731 = vpop.f32.mrb[0].mxu0
        %v732 = vpop.f32.mrb[0].mxu0
        %v733 = vpop.f32.mrb[0].mxu0
        %734 = vdwg.mxu0
        %v735 = vmul.f32 %v730, 0.35355338
        %v736 = vsel %vm566, %v735, -inf
        %737 = vmax.xlane.f32.xlu0 %v736
        %v738 = vpop.xlane.xlu0 %737
        %v739 = vsub.f32 %v735, %v738
        %v740 = vmul.f32 %v739, 1.442695
        %v741 = vpow.pop %v740
        %v742 = vsel %vm566, %v741, 0.0
        %743 = vadd.xlane.f32.xlu0 %v742
        %v744 = vpop.xlane.xlu0 %743
        %v745 = vrcp.pop %v744
        %v746 = vmul.f32 %v741, %v745
        %v747 = vpack.c.bf16 %v746, %v746
        %748 = vrot.lane.b32.xlu0 %v514, 56
        %v749 = vpop.permute.xlu0 %748
        %v751 = vsel %vm581, %v747, 0
        %v754 = vsel %vm585, %v749, 0
        %756 = vmatprep.subr.bf16.mxu0 0
        %757 = vmatpush1.bf16.msra.mxu0 %v754
        %758 = vmatprep.subr.bf16.mxu0 0
        %759 = vmatpush1.bf16.msra.mxu0 0
        %760 = vmatprep.subr.bf16.mxu0 0
        %761 = vmatpush1.bf16.msra.mxu0 0
        %762 = vmatprep.subr.bf16.mxu0 0
        %763 = vmatpush1.bf16.msra.mxu0 0
        %764 = vmatprep.subr.bf16.mxu0 0
        %765 = vmatpush1.bf16.msra.mxu0 0
        %766 = vmatprep.subr.bf16.mxu0 0
        %767 = vmatpush1.bf16.msra.mxu0 0
        %768 = vmatprep.subr.bf16.mxu0 0
        %769 = vmatpush1.bf16.msra.mxu0 0
        %770 = vmatprep.subr.bf16.mxu0 0
        %771 = vmatpush1.bf16.msra.mxu0 0
        %772 = vmatprep.subr.bf16.mxu0 0
        %773 = vmatpush1.bf16.msra.mxu0 0
        %774 = vmatprep.subr.bf16.mxu0 0
        %775 = vmatpush1.bf16.msra.mxu0 0
        %776 = vmatprep.subr.bf16.mxu0 0
        %777 = vmatpush1.bf16.msra.mxu0 0
        %778 = vmatprep.subr.bf16.mxu0 0
        %779 = vmatpush1.bf16.msra.mxu0 0
        %780 = vmatprep.subr.bf16.mxu0 0
        %781 = vmatpush1.bf16.msra.mxu0 0
        %782 = vmatprep.subr.bf16.mxu0 0
        %783 = vmatpush1.bf16.msra.mxu0 0
        %784 = vmatprep.subr.bf16.mxu0 0
        %785 = vmatpush1.bf16.msra.mxu0 0
        %786 = vmatprep.subr.bf16.mxu0 0
        %787 = vmatpush1.bf16.msra.mxu0 0
        %788 = vmatprep.mubr.bf16.mxu0 0
        %789 = vmatmul.mubr.bf16.gmra.mrb[0].mxu0 %v751
        %v790 = vpop.f32.mrb[0].mxu0
        %v791 = vadd.f32 0.0, %v790
        %v792 = vpop.f32.mrb[0].mxu0
        %v793 = vpop.f32.mrb[0].mxu0
        %v794 = vpop.f32.mrb[0].mxu0
        %795 = vdwg.mxu0
        %v796 = vpack.c.bf16 %v791, %v791
        %v797 = vld [vmem:[%s3 + $0x4] sm:$0xf]
        %v799 = vsel %vm518, %v796, 0
        %v802 = vsel %vm634, %v797, 0
        %804 = vmatprep.subr.bf16.mxu0 0
        %805 = vmatpush1.bf16.msra.mxu0 %v802
        %806 = vmatprep.subr.bf16.mxu0 0
        %807 = vmatpush1.bf16.msra.mxu0 0
        %808 = vmatprep.subr.bf16.mxu0 0
        %809 = vmatpush1.bf16.msra.mxu0 0
        %810 = vmatprep.subr.bf16.mxu0 0
        %811 = vmatpush1.bf16.msra.mxu0 0
        %812 = vmatprep.subr.bf16.mxu0 0
        %813 = vmatpush1.bf16.msra.mxu0 0
        %814 = vmatprep.subr.bf16.mxu0 0
        %815 = vmatpush1.bf16.msra.mxu0 0
        %816 = vmatprep.subr.bf16.mxu0 0
        %817 = vmatpush1.bf16.msra.mxu0 0
        %818 = vmatprep.subr.bf16.mxu0 0
        %819 = vmatpush1.bf16.msra.mxu0 0
        %820 = vmatprep.subr.bf16.mxu0 0
        %821 = vmatpush1.bf16.msra.mxu0 0
        %822 = vmatprep.subr.bf16.mxu0 0
        %823 = vmatpush1.bf16.msra.mxu0 0
        %824 = vmatprep.subr.bf16.mxu0 0
        %825 = vmatpush1.bf16.msra.mxu0 0
        %826 = vmatprep.subr.bf16.mxu0 0
        %827 = vmatpush1.bf16.msra.mxu0 0
        %828 = vmatprep.subr.bf16.mxu0 0
        %829 = vmatpush1.bf16.msra.mxu0 0
        %830 = vmatprep.subr.bf16.mxu0 0
        %831 = vmatpush1.bf16.msra.mxu0 0
        %832 = vmatprep.subr.bf16.mxu0 0
        %833 = vmatpush1.bf16.msra.mxu0 0
        %834 = vmatprep.subr.bf16.mxu0 0
        %835 = vmatpush1.bf16.msra.mxu0 0
        %836 = vmatprep.mubr.bf16.mxu0 0
        %837 = vmatmul.mubr.bf16.gmra.mrb[0].mxu0 %v799
        %v838 = vpop.f32.mrb[0].mxu0
        %v839 = vadd.f32 0.0, %v838
        %v840 = vpop.f32.mrb[0].mxu0
        %v841 = vpop.f32.mrb[0].mxu0
        %v842 = vpop.f32.mrb[0].mxu0
        %843 = vdwg.mxu0
        %v844 = vadd.f32 %v684, %v839
        %845 = vrot.lane.b32.xlu0 %v514, 112
        %v846 = vpop.permute.xlu0 %845
        %847 = vrot.lane.b32.xlu0 %v514, 80
        %v848 = vpop.permute.xlu0 %847
        %v850 = vsel %vm518, %v846, 0
        %v853 = vsel %vm518, %v848, 0
        %855 = vmatprep.subr.bf16.mxu0 0
        %856 = vmatpush1.bf16.xpose.msra.mxu0 %v853
        %857 = vmatprep.subr.bf16.mxu0 0
        %858 = vmatpush1.bf16.xpose.msra.mxu0 0
        %859 = vmatprep.subr.bf16.mxu0 0
        %860 = vmatpush1.bf16.xpose.msra.mxu0 0
        %861 = vmatprep.subr.bf16.mxu0 0
        %862 = vmatpush1.bf16.xpose.msra.mxu0 0
        %863 = vmatprep.subr.bf16.mxu0 0
        %864 = vmatpush1.bf16.xpose.msra.mxu0 0
        %865 = vmatprep.subr.bf16.mxu0 0
        %866 = vmatpush1.bf16.xpose.msra.mxu0 0
        %867 = vmatprep.subr.bf16.mxu0 0
        %868 = vmatpush1.bf16.xpose.msra.mxu0 0
        %869 = vmatprep.subr.bf16.mxu0 0
        %870 = vmatpush1.bf16.xpose.msra.mxu0 0
        %871 = vmatprep.subr.bf16.mxu0 0
        %872 = vmatpush1.bf16.xpose.msra.mxu0 0
        %873 = vmatprep.subr.bf16.mxu0 0
        %874 = vmatpush1.bf16.xpose.msra.mxu0 0
        %875 = vmatprep.subr.bf16.mxu0 0
        %876 = vmatpush1.bf16.xpose.msra.mxu0 0
        %877 = vmatprep.subr.bf16.mxu0 0
        %878 = vmatpush1.bf16.xpose.msra.mxu0 0
        %879 = vmatprep.subr.bf16.mxu0 0
        %880 = vmatpush1.bf16.xpose.msra.mxu0 0
        %881 = vmatprep.subr.bf16.mxu0 0
        %882 = vmatpush1.bf16.xpose.msra.mxu0 0
        %883 = vmatprep.subr.bf16.mxu0 0
        %884 = vmatpush1.bf16.xpose.msra.mxu0 0
        %885 = vmatprep.subr.bf16.mxu0 0
        %886 = vmatpush1.bf16.xpose.msra.mxu0 0
        %887 = vmatprep.mubr.bf16.mxu0 0
        %888 = vmatmul.mubr.bf16.gmra.mrb[0].mxu0 %v850
        %v889 = vpop.f32.mrb[0].mxu0
        %v890 = vadd.f32 0.0, %v889
        %v891 = vpop.f32.mrb[0].mxu0
        %v892 = vpop.f32.mrb[0].mxu0
        %v893 = vpop.f32.mrb[0].mxu0
        %894 = vdwg.mxu0
        %v895 = vmul.f32 %v890, 0.35355338
        %v896 = vsel %vm566, %v895, -inf
        %897 = vmax.xlane.f32.xlu0 %v896
        %v898 = vpop.xlane.xlu0 %897
        %v899 = vsub.f32 %v895, %v898
        %v900 = vmul.f32 %v899, 1.442695
        %v901 = vpow.pop %v900
        %v902 = vsel %vm566, %v901, 0.0
        %903 = vadd.xlane.f32.xlu0 %v902
        %v904 = vpop.xlane.xlu0 %903
        %v905 = vrcp.pop %v904
        %v906 = vmul.f32 %v901, %v905
        %v907 = vpack.c.bf16 %v906, %v906
        %908 = vrot.lane.b32.xlu0 %v514, 48
        %v909 = vpop.permute.xlu0 %908
        %v911 = vsel %vm581, %v907, 0
        %v914 = vsel %vm585, %v909, 0
        %916 = vmatprep.subr.bf16.mxu0 0
        %917 = vmatpush1.bf16.msra.mxu0 %v914
        %918 = vmatprep.subr.bf16.mxu0 0
        %919 = vmatpush1.bf16.msra.mxu0 0
        %920 = vmatprep.subr.bf16.mxu0 0
        %921 = vmatpush1.bf16.msra.mxu0 0
        %922 = vmatprep.subr.bf16.mxu0 0
        %923 = vmatpush1.bf16.msra.mxu0 0
        %924 = vmatprep.subr.bf16.mxu0 0
        %925 = vmatpush1.bf16.msra.mxu0 0
        %926 = vmatprep.subr.bf16.mxu0 0
        %927 = vmatpush1.bf16.msra.mxu0 0
        %928 = vmatprep.subr.bf16.mxu0 0
        %929 = vmatpush1.bf16.msra.mxu0 0
        %930 = vmatprep.subr.bf16.mxu0 0
        %931 = vmatpush1.bf16.msra.mxu0 0
        %932 = vmatprep.subr.bf16.mxu0 0
        %933 = vmatpush1.bf16.msra.mxu0 0
        %934 = vmatprep.subr.bf16.mxu0 0
        %935 = vmatpush1.bf16.msra.mxu0 0
        %936 = vmatprep.subr.bf16.mxu0 0
        %937 = vmatpush1.bf16.msra.mxu0 0
        %938 = vmatprep.subr.bf16.mxu0 0
        %939 = vmatpush1.bf16.msra.mxu0 0
        %940 = vmatprep.subr.bf16.mxu0 0
        %941 = vmatpush1.bf16.msra.mxu0 0
        %942 = vmatprep.subr.bf16.mxu0 0
        %943 = vmatpush1.bf16.msra.mxu0 0
        %944 = vmatprep.subr.bf16.mxu0 0
        %945 = vmatpush1.bf16.msra.mxu0 0
        %946 = vmatprep.subr.bf16.mxu0 0
        %947 = vmatpush1.bf16.msra.mxu0 0
        %948 = vmatprep.mubr.bf16.mxu0 0
        %949 = vmatmul.mubr.bf16.gmra.mrb[0].mxu0 %v911
        %v950 = vpop.f32.mrb[0].mxu0
        %v951 = vadd.f32 0.0, %v950
        %v952 = vpop.f32.mrb[0].mxu0
        %v953 = vpop.f32.mrb[0].mxu0
        %v954 = vpop.f32.mrb[0].mxu0
        %955 = vdwg.mxu0
        %v956 = vpack.c.bf16 %v951, %v951
        %v957 = vld [vmem:[%s3 + $0x8] sm:$0xf]
        %v959 = vsel %vm518, %v956, 0
        %v962 = vsel %vm634, %v957, 0
        %964 = vmatprep.subr.bf16.mxu0 0
        %965 = vmatpush1.bf16.msra.mxu0 %v962
        %966 = vmatprep.subr.bf16.mxu0 0
        %967 = vmatpush1.bf16.msra.mxu0 0
        %968 = vmatprep.subr.bf16.mxu0 0
        %969 = vmatpush1.bf16.msra.mxu0 0
        %970 = vmatprep.subr.bf16.mxu0 0
        %971 = vmatpush1.bf16.msra.mxu0 0
        %972 = vmatprep.subr.bf16.mxu0 0
        %973 = vmatpush1.bf16.msra.mxu0 0
        %974 = vmatprep.subr.bf16.mxu0 0
        %975 = vmatpush1.bf16.msra.mxu0 0
        %976 = vmatprep.subr.bf16.mxu0 0
        %977 = vmatpush1.bf16.msra.mxu0 0
        %978 = vmatprep.subr.bf16.mxu0 0
        %979 = vmatpush1.bf16.msra.mxu0 0
        %980 = vmatprep.subr.bf16.mxu0 0
        %981 = vmatpush1.bf16.msra.mxu0 0
        %982 = vmatprep.subr.bf16.mxu0 0
        %983 = vmatpush1.bf16.msra.mxu0 0
        %984 = vmatprep.subr.bf16.mxu0 0
        %985 = vmatpush1.bf16.msra.mxu0 0
        %986 = vmatprep.subr.bf16.mxu0 0
        %987 = vmatpush1.bf16.msra.mxu0 0
        %988 = vmatprep.subr.bf16.mxu0 0
        %989 = vmatpush1.bf16.msra.mxu0 0
        %990 = vmatprep.subr.bf16.mxu0 0
        %991 = vmatpush1.bf16.msra.mxu0 0
        %992 = vmatprep.subr.bf16.mxu0 0
        %993 = vmatpush1.bf16.msra.mxu0 0
        %994 = vmatprep.subr.bf16.mxu0 0
        %995 = vmatpush1.bf16.msra.mxu0 0
        %996 = vmatprep.mubr.bf16.mxu0 0
        %997 = vmatmul.mubr.bf16.gmra.mrb[0].mxu0 %v959
        %v998 = vpop.f32.mrb[0].mxu0
        %v999 = vadd.f32 0.0, %v998
        %v1000 = vpop.f32.mrb[0].mxu0
        %v1001 = vpop.f32.mrb[0].mxu0
        %v1002 = vpop.f32.mrb[0].mxu0
        %1003 = vdwg.mxu0
        %v1004 = vadd.f32 %v844, %v999
        %1005 = vrot.lane.b32.xlu0 %v514, 104
        %v1006 = vpop.permute.xlu0 %1005
        %1007 = vrot.lane.b32.xlu0 %v514, 72
        %v1008 = vpop.permute.xlu0 %1007
        %v1010 = vsel %vm518, %v1006, 0
        %v1013 = vsel %vm518, %v1008, 0
        %1015 = vmatprep.subr.bf16.mxu0 0
        %1016 = vmatpush1.bf16.xpose.msra.mxu0 %v1013
        %1017 = vmatprep.subr.bf16.mxu0 0
        %1018 = vmatpush1.bf16.xpose.msra.mxu0 0
        %1019 = vmatprep.subr.bf16.mxu0 0
        %1020 = vmatpush1.bf16.xpose.msra.mxu0 0
        %1021 = vmatprep.subr.bf16.mxu0 0
        %1022 = vmatpush1.bf16.xpose.msra.mxu0 0
        %1023 = vmatprep.subr.bf16.mxu0 0
        %1024 = vmatpush1.bf16.xpose.msra.mxu0 0
        %1025 = vmatprep.subr.bf16.mxu0 0
        %1026 = vmatpush1.bf16.xpose.msra.mxu0 0
        %1027 = vmatprep.subr.bf16.mxu0 0
        %1028 = vmatpush1.bf16.xpose.msra.mxu0 0
        %1029 = vmatprep.subr.bf16.mxu0 0
        %1030 = vmatpush1.bf16.xpose.msra.mxu0 0
        %1031 = vmatprep.subr.bf16.mxu0 0
        %1032 = vmatpush1.bf16.xpose.msra.mxu0 0
        %1033 = vmatprep.subr.bf16.mxu0 0
        %1034 = vmatpush1.bf16.xpose.msra.mxu0 0
        %1035 = vmatprep.subr.bf16.mxu0 0
        %1036 = vmatpush1.bf16.xpose.msra.mxu0 0
        %1037 = vmatprep.subr.bf16.mxu0 0
        %1038 = vmatpush1.bf16.xpose.msra.mxu0 0
        %1039 = vmatprep.subr.bf16.mxu0 0
        %1040 = vmatpush1.bf16.xpose.msra.mxu0 0
        %1041 = vmatprep.subr.bf16.mxu0 0
        %1042 = vmatpush1.bf16.xpose.msra.mxu0 0
        %1043 = vmatprep.subr.bf16.mxu0 0
        %1044 = vmatpush1.bf16.xpose.msra.mxu0 0
        %1045 = vmatprep.subr.bf16.mxu0 0
        %1046 = vmatpush1.bf16.xpose.msra.mxu0 0
        %1047 = vmatprep.mubr.bf16.mxu0 0
        %1048 = vmatmul.mubr.bf16.gmra.mrb[0].mxu0 %v1010
        %v1049 = vpop.f32.mrb[0].mxu0
        %v1050 = vadd.f32 0.0, %v1049
        %v1051 = vpop.f32.mrb[0].mxu0
        %v1052 = vpop.f32.mrb[0].mxu0
        %v1053 = vpop.f32.mrb[0].mxu0
        %1054 = vdwg.mxu0
        %v1055 = vmul.f32 %v1050, 0.35355338
        %v1056 = vsel %vm566, %v1055, -inf
        %1057 = vmax.xlane.f32.xlu0 %v1056
        %v1058 = vpop.xlane.xlu0 %1057
        %v1059 = vsub.f32 %v1055, %v1058
        %v1060 = vmul.f32 %v1059, 1.442695
        %v1061 = vpow.pop %v1060
        %v1062 = vsel %vm566, %v1061, 0.0
        %1063 = vadd.xlane.f32.xlu0 %v1062
        %v1064 = vpop.xlane.xlu0 %1063
        %v1065 = vrcp.pop %v1064
        %v1066 = vmul.f32 %v1061, %v1065
        %v1067 = vpack.c.bf16 %v1066, %v1066
        %1068 = vrot.lane.b32.xlu0 %v514, 40
        %v1069 = vpop.permute.xlu0 %1068
        %v1071 = vsel %vm581, %v1067, 0
        %v1074 = vsel %vm585, %v1069, 0
        %1076 = vmatprep.subr.bf16.mxu0 0
        %1077 = vmatpush1.bf16.msra.mxu0 %v1074
        %1078 = vmatprep.subr.bf16.mxu0 0
        %1079 = vmatpush1.bf16.msra.mxu0 0
        %1080 = vmatprep.subr.bf16.mxu0 0
        %1081 = vmatpush1.bf16.msra.mxu0 0
        %1082 = vmatprep.subr.bf16.mxu0 0
        %1083 = vmatpush1.bf16.msra.mxu0 0
        %1084 = vmatprep.subr.bf16.mxu0 0
        %1085 = vmatpush1.bf16.msra.mxu0 0
        %1086 = vmatprep.subr.bf16.mxu0 0
        %1087 = vmatpush1.bf16.msra.mxu0 0
        %1088 = vmatprep.subr.bf16.mxu0 0
        %1089 = vmatpush1.bf16.msra.mxu0 0
        %1090 = vmatprep.subr.bf16.mxu0 0
        %1091 = vmatpush1.bf16.msra.mxu0 0
        %1092 = vmatprep.subr.bf16.mxu0 0
        %1093 = vmatpush1.bf16.msra.mxu0 0
        %1094 = vmatprep.subr.bf16.mxu0 0
        %1095 = vmatpush1.bf16.msra.mxu0 0
        %1096 = vmatprep.subr.bf16.mxu0 0
        %1097 = vmatpush1.bf16.msra.mxu0 0
        %1098 = vmatprep.subr.bf16.mxu0 0
        %1099 = vmatpush1.bf16.msra.mxu0 0
        %1100 = vmatprep.subr.bf16.mxu0 0
        %1101 = vmatpush1.bf16.msra.mxu0 0
        %1102 = vmatprep.subr.bf16.mxu0 0
        %1103 = vmatpush1.bf16.msra.mxu0 0
        %1104 = vmatprep.subr.bf16.mxu0 0
        %1105 = vmatpush1.bf16.msra.mxu0 0
        %1106 = vmatprep.subr.bf16.mxu0 0
        %1107 = vmatpush1.bf16.msra.mxu0 0
        %1108 = vmatprep.mubr.bf16.mxu0 0
        %1109 = vmatmul.mubr.bf16.gmra.mrb[0].mxu0 %v1071
        %v1110 = vpop.f32.mrb[0].mxu0
        %v1111 = vadd.f32 0.0, %v1110
        %v1112 = vpop.f32.mrb[0].mxu0
        %v1113 = vpop.f32.mrb[0].mxu0
        %v1114 = vpop.f32.mrb[0].mxu0
        %1115 = vdwg.mxu0
        %v1116 = vpack.c.bf16 %v1111, %v1111
        %v1117 = vld [vmem:[%s3 + $0xc] sm:$0xf]
        %v1119 = vsel %vm518, %v1116, 0
        %v1122 = vsel %vm634, %v1117, 0
        %1124 = vmatprep.subr.bf16.mxu0 0
        %1125 = vmatpush1.bf16.msra.mxu0 %v1122
        %1126 = vmatprep.subr.bf16.mxu0 0
        %1127 = vmatpush1.bf16.msra.mxu0 0
        %1128 = vmatprep.subr.bf16.mxu0 0
        %1129 = vmatpush1.bf16.msra.mxu0 0
        %1130 = vmatprep.subr.bf16.mxu0 0
        %1131 = vmatpush1.bf16.msra.mxu0 0
        %1132 = vmatprep.subr.bf16.mxu0 0
        %1133 = vmatpush1.bf16.msra.mxu0 0
        %1134 = vmatprep.subr.bf16.mxu0 0
        %1135 = vmatpush1.bf16.msra.mxu0 0
        %1136 = vmatprep.subr.bf16.mxu0 0
        %1137 = vmatpush1.bf16.msra.mxu0 0
        %1138 = vmatprep.subr.bf16.mxu0 0
        %1139 = vmatpush1.bf16.msra.mxu0 0
        %1140 = vmatprep.subr.bf16.mxu0 0
        %1141 = vmatpush1.bf16.msra.mxu0 0
        %1142 = vmatprep.subr.bf16.mxu0 0
        %1143 = vmatpush1.bf16.msra.mxu0 0
        %1144 = vmatprep.subr.bf16.mxu0 0
        %1145 = vmatpush1.bf16.msra.mxu0 0
        %1146 = vmatprep.subr.bf16.mxu0 0
        %1147 = vmatpush1.bf16.msra.mxu0 0
        %1148 = vmatprep.subr.bf16.mxu0 0
        %1149 = vmatpush1.bf16.msra.mxu0 0
        %1150 = vmatprep.subr.bf16.mxu0 0
        %1151 = vmatpush1.bf16.msra.mxu0 0
        %1152 = vmatprep.subr.bf16.mxu0 0
        %1153 = vmatpush1.bf16.msra.mxu0 0
        %1154 = vmatprep.subr.bf16.mxu0 0
        %1155 = vmatpush1.bf16.msra.mxu0 0
        %1156 = vmatprep.mubr.bf16.mxu0 0
        %1157 = vmatmul.mubr.bf16.gmra.mrb[0].mxu0 %v1119
        %v1158 = vpop.f32.mrb[0].mxu0
        %v1159 = vadd.f32 0.0, %v1158
        %v1160 = vpop.f32.mrb[0].mxu0
        %v1161 = vpop.f32.mrb[0].mxu0
        %v1162 = vpop.f32.mrb[0].mxu0
        %1163 = vdwg.mxu0
        %v1164 = vadd.f32 %v1004, %v1159
        %v1165 = vadd.f32 %v444, %v1164
        %v1166 = vld [vmem:[%s5] sm:$0x1]
        %v1167 = vld [vmem:[%s6] sm:$0x1]
        %vm1168 = vcmask 254976
        %v1169 = vsel %vm1168, %v1165, 0.0
        %1170 = vadd.xlane.f32.xlu0 %v1169
        %v1171 = vpop.xlane.xlu0 %1170
        %v1172 = vrcp.pop 32.0
        %v1173 = vmul.f32 %v1171, %v1172
        %v1174 = vsub.f32 %v1165, %v1173
        %v1175 = vmul.f32 %v1174, %v1174
        %v1176 = vsel %vm1168, %v1175, 0.0
        %1177 = vadd.xlane.f32.xlu0 %v1176
        %v1178 = vpop.xlane.xlu0 %1177
        %v1179 = vmul.f32 %v1178, %v1172
        %v1180 = vadd.f32 %v1179, 1e-05
        %v1181 = vrsqrt.pop %v1180
        %v1182 = vmul.f32 %v1174, %v1181
        %v1184 = vlaneseq
        %v1185 = vshrl.u32 %v1184, 7
        %v1186 = vsub.s32 0, %v1185
        %v1187 = vrot.slane %v1166, %v1186
        %v1189 = vmul.f32 %v1182, %v1187
        %v1191 = vlaneseq
        %v1192 = vshrl.u32 %v1191, 7
        %v1193 = vsub.s32 0, %v1192
        %v1194 = vrot.slane %v1167, %v1193
        %v1196 = vadd.f32 %v1189, %v1194
        %v1197 = vpack.c.bf16 %v1196, %v1196
        %v1198 = vld [vmem:[%s7] sm:$0xf]
        %v1199 = vld [vmem:[%s7 + $0x4] sm:$0xf]
        %v1200 = vld [vmem:[%s7 + $0x8] sm:$0xf]
        %v1201 = vld [vmem:[%s7 + $0xc] sm:$0xf]
        %v1202 = vld [vmem:[%s8] sm:$0x1]
        %v1204 = vlaneseq
        %v1205 = vshrl.u32 %v1204, 7
        %v1206 = vsub.s32 0, %v1205
        %v1207 = vrot.slane %v1202, %v1206
        %v1213 = vunpack.c.l.b16 %v1198
        %v1214 = vunpack.c.l.b16 %v1199
        %v1215 = vunpack.c.l.b16 %v1200
        %v1216 = vunpack.c.l.b16 %v1201
        %v1217 = vpack.c.b16 %v1214, %v1213
        %v1218 = vpack.c.b16 %v1216, %v1215
        %v1222 = vsel %vm469, %v1197, 0
        %1224 = vmatprep.subr.bf16.mxu0 0
        %1225 = vmatpush1.bf16.msra.mxu0 %v1217
        %1226 = vmatprep.subr.bf16.mxu0 0
        %1227 = vmatpush1.bf16.msra.mxu0 %v1218
        %1228 = vmatprep.subr.bf16.mxu0 0
        %1229 = vmatpush1.bf16.msra.mxu0 0
        %1230 = vmatprep.subr.bf16.mxu0 0
        %1231 = vmatpush1.bf16.msra.mxu0 0
        %1232 = vmatprep.subr.bf16.mxu0 0
        %1233 = vmatpush1.bf16.msra.mxu0 0
        %1234 = vmatprep.subr.bf16.mxu0 0
        %1235 = vmatpush1.bf16.msra.mxu0 0
        %1236 = vmatprep.subr.bf16.mxu0 0
        %1237 = vmatpush1.bf16.msra.mxu0 0
        %1238 = vmatprep.subr.bf16.mxu0 0
        %1239 = vmatpush1.bf16.msra.mxu0 0
        %1240 = vmatprep.subr.bf16.mxu0 0
        %1241 = vmatpush1.bf16.msra.mxu0 0
        %1242 = vmatprep.subr.bf16.mxu0 0
        %1243 = vmatpush1.bf16.msra.mxu0 0
        %1244 = vmatprep.subr.bf16.mxu0 0
        %1245 = vmatpush1.bf16.msra.mxu0 0
        %1246 = vmatprep.subr.bf16.mxu0 0
        %1247 = vmatpush1.bf16.msra.mxu0 0
        %1248 = vmatprep.subr.bf16.mxu0 0
        %1249 = vmatpush1.bf16.msra.mxu0 0
        %1250 = vmatprep.subr.bf16.mxu0 0
        %1251 = vmatpush1.bf16.msra.mxu0 0
        %1252 = vmatprep.subr.bf16.mxu0 0
        %1253 = vmatpush1.bf16.msra.mxu0 0
        %1254 = vmatprep.subr.bf16.mxu0 0
        %1255 = vmatpush1.bf16.msra.mxu0 0
        %1256 = vmatprep.mubr.bf16.mxu0 0
        %1257 = vmatmul.mubr.bf16.gmra.mrb[0].mxu0 %v1222
        %v1258 = vpop.f32.mrb[0].mxu0
        %v1259 = vadd.f32 %v1207, %v1258
        %v1260 = vpop.f32.mrb[0].mxu0
        %v1261 = vpop.f32.mrb[0].mxu0
        %v1262 = vpop.f32.mrb[0].mxu0
        %1263 = vdwg.mxu0
        %v1264 = vmax.f32 %v1259, 0.0
        %v1265 = vpack.c.bf16 %v1264, %v1264
        %v1266 = vld [vmem:[%s9] sm:$0xf]
        %v1267 = vld [vmem:[%s9 + $0x4] sm:$0xf]
        %v1268 = vld [vmem:[%s9 + $0x8] sm:$0xf]
        %v1269 = vld [vmem:[%s9 + $0xc] sm:$0xf]
        %v1270 = vld [vmem:[%s9 + $0x10] sm:$0xf]
        %v1271 = vld [vmem:[%s9 + $0x14] sm:$0xf]
        %v1272 = vld [vmem:[%s9 + $0x18] sm:$0xf]
        %v1273 = vld [vmem:[%s9 + $0x1c] sm:$0xf]
        %v1274 = vld [vmem:[%s10] sm:$0x1]
        %v1276 = vlaneseq
        %v1277 = vshrl.u32 %v1276, 7
        %v1278 = vsub.s32 0, %v1277
        %v1279 = vrot.slane %v1274, %v1278
        %v1289 = vunpack.c.l.b16 %v1266
        %v1290 = vunpack.c.l.b16 %v1267
        %v1291 = vunpack.c.l.b16 %v1268
        %v1292 = vunpack.c.l.b16 %v1269
        %v1293 = vunpack.c.l.b16 %v1270
        %v1294 = vunpack.c.l.b16 %v1271
        %v1295 = vunpack.c.l.b16 %v1272
        %v1296 = vunpack.c.l.b16 %v1273
        %v1297 = vpack.c.b16 %v1290, %v1289
        %v1298 = vpack.c.b16 %v1292, %v1291
        %v1299 = vpack.c.b16 %v1294, %v1293
        %v1300 = vpack.c.b16 %v1296, %v1295
        %vm1305 = vcmask 523264
        %v1307 = vsel %vm1305, %v1265, 0
        %1309 = vmatprep.subr.bf16.mxu0 0
        %1310 = vmatpush1.bf16.msra.mxu0 %v1297
        %1311 = vmatprep.subr.bf16.mxu0 0
        %1312 = vmatpush1.bf16.msra.mxu0 %v1298
        %1313 = vmatprep.subr.bf16.mxu0 0
        %1314 = vmatpush1.bf16.msra.mxu0 %v1299
        %1315 = vmatprep.subr.bf16.mxu0 0
        %1316 = vmatpush1.bf16.msra.mxu0 %v1300
        %1317 = vmatprep.subr.bf16.mxu0 0
        %1318 = vmatpush1.bf16.msra.mxu0 0
        %1319 = vmatprep.subr.bf16.mxu0 0
        %1320 = vmatpush1.bf16.msra.mxu0 0
        %1321 = vmatprep.subr.bf16.mxu0 0
        %1322 = vmatpush1.bf16.msra.mxu0 0
        %1323 = vmatprep.subr.bf16.mxu0 0
        %1324 = vmatpush1.bf16.msra.mxu0 0
        %1325 = vmatprep.subr.bf16.mxu0 0
        %1326 = vmatpush1.bf16.msra.mxu0 0
        %1327 = vmatprep.subr.bf16.mxu0 0
        %1328 = vmatpush1.bf16.msra.mxu0 0
        %1329 = vmatprep.subr.bf16.mxu0 0
        %1330 = vmatpush1.bf16.msra.mxu0 0
        %1331 = vmatprep.subr.bf16.mxu0 0
        %1332 = vmatpush1.bf16.msra.mxu0 0
        %1333 = vmatprep.subr.bf16.mxu0 0
        %1334 = vmatpush1.bf16.msra.mxu0 0
        %1335 = vmatprep.subr.bf16.mxu0 0
        %1336 = vmatpush1.bf16.msra.mxu0 0
        %1337 = vmatprep.subr.bf16.mxu0 0
        %1338 = vmatpush1.bf16.msra.mxu0 0
        %1339 = vmatprep.subr.bf16.mxu0 0
        %1340 = vmatpush1.bf16.msra.mxu0 0
        %1341 = vmatprep.mubr.bf16.mxu0 0
        %1342 = vmatmul.mubr.bf16.gmra.mrb[0].mxu0 %v1307
        %v1343 = vpop.f32.mrb[0].mxu0
        %v1344 = vadd.f32 %v1279, %v1343
        %v1345 = vpop.f32.mrb[0].mxu0
        %v1346 = vpop.f32.mrb[0].mxu0
        %v1347 = vpop.f32.mrb[0].mxu0
        %1348 = vdwg.mxu0
        %v1349 = vadd.f32 %v1196, %v1344
        %v1350 = vld [vmem:[%s11] sm:$0x1]
        %v1351 = vld [vmem:[%s12] sm:$0x1]
        %v1352 = vsel %vm1168, %v1349, 0.0
        %1353 = vadd.xlane.f32.xlu0 %v1352
        %v1354 = vpop.xlane.xlu0 %1353
        %v1355 = vmul.f32 %v1354, %v1172
        %v1356 = vsub.f32 %v1349, %v1355
        %v1357 = vmul.f32 %v1356, %v1356
        %v1358 = vsel %vm1168, %v1357, 0.0
        %1359 = vadd.xlane.f32.xlu0 %v1358
        %v1360 = vpop.xlane.xlu0 %1359
        %v1361 = vmul.f32 %v1360, %v1172
        %v1362 = vadd.f32 %v1361, 1e-05
        %v1363 = vrsqrt.pop %v1362
        %v1364 = vmul.f32 %v1356, %v1363
        %v1366 = vlaneseq
        %v1367 = vshrl.u32 %v1366, 7
        %v1368 = vsub.s32 0, %v1367
        %v1369 = vrot.slane %v1350, %v1368
        %v1371 = vmul.f32 %v1364, %v1369
        %v1373 = vlaneseq
        %v1374 = vshrl.u32 %v1373, 7
        %v1375 = vsub.s32 0, %v1374
        %v1376 = vrot.slane %v1351, %v1375
        %v1378 = vadd.f32 %v1371, %v1376
      $region77: #{model_forward.2} parent=71 // loop_footer
        %s443 = sadd.s32 1, %s439
      $region78: #{model_forward.2} parent=71 // loop_footer_branch
        %438 = sbr.rel target = $region74
      $region79: #{model_forward.2} parent=71 // loop_exit
        _
      %vm1379 = vcmask 254976
      %1380 = vst.msk [vmem:[%s435] sm:$0x3] %vm1379, %v444
      %p1381 = scmp.lt.s32.totalorder %s24, 7
      %s1382 = scalar_select %p1381, %s24, 7
      %s1383 = smul.addr %s1382, 2
      %s1384 = scalar_lea.vmem %s13, %s1383
      // Predicated region
      $region80: #{model_forward.2} parent=71 // pred_check
        %p1385 = pneg %p320
      $region81: #{model_forward.2} parent=71 // pred_check_branch
        %1387 = sbr.rel (%p1385) target = $region83
      $region82: #{model_forward.2} parent=71 // pred_region
        _
      $region83: #{model_forward.2} parent=71 // pred_fallthru
        _
    $region72: #{model_forward.2} parent=5 // pred_fallthru
      _
    %p1388 = scmp.le.s32.totalorder 2, %s19
    // Predicated region
    $region84: #{model_forward.2} parent=5 // pred_check
      %p1389 = pneg %p1388
    $region85: #{model_forward.2} parent=5 // pred_check_branch
      %1391 = sbr.rel (%p1389) target = $region87
    $region86: #{model_forward.2} parent=5 // pred_region
      %s1392 = ssub.s32 %s19, 2
      // Predicated region
      $region88: #{model_forward.2} parent=86 // pred_check
        %p1393 = pneg %p326
      $region89: #{model_forward.2} parent=86 // pred_check_branch
        %1395 = sbr.rel (%p1393) target = $region91
      $region90: #{model_forward.2} parent=86 // pred_region
        %p1396 = scmp.lt.s32.totalorder %s25, 7
        %s1397 = scalar_select %p1396, %s25, 7
        %s1398 = smul.addr %s1397, 2
        %s1399 = scalar_lea.vmem %s13, %s1398
      $region91: #{model_forward.2} parent=86 // pred_fallthru
        _
    $region87: #{model_forward.2} parent=5 // pred_fallthru
      _
  $region6: #{model_forward.2} parent=0 // loop_footer
    %s23 = sadd.s32 1, %s19
  $region7: #{model_forward.2} parent=0 // loop_footer_branch
    %18 = sbr.rel target = $region3
  $region8: #{model_forward.2} parent=0 // loop_exit
    _

</llo_original>
